<compile_context>
chip_gen: v7x
topology: tpu7x:2x2x1
jax: 0.10.0
libtpu: 0.0.40
codegen_flags: <defaults>
</compile_context>

<pallas_src>
import math
import jax
import jax.numpy as jnp
from jax import lax
from jax.experimental import pallas as pl
from jax.experimental.pallas import tpu as pltpu

N = 16          # nodes per graph
HIDDEN = 32     # in_dim
HEADS = 4       # ResidualGraphConv takes `heads` but never uses it in forward
E = 48          # directed edges per graph
B = 8           # graphs in the batch
GB = 8          # graphs packed per grid block -> (GB*N, HIDDEN) = (128, 32), grid=(1,)
LN_EPS = 1e-5


def gcn_kernel(x_ref, ei_ref, g_ref, b_ref, w_ref, bias_ref, o_ref):
    x = x_ref[...]                                   # (M, H) raw node features, M = GB*N
    M = x.shape[0]
    EE = ei_ref.shape[1]

    # ---- LayerNorm (torch.nn.LayerNorm: biased variance, eps=1e-5) ----
    mu = jnp.mean(x, axis=-1, keepdims=True)
    var = jnp.mean((x - mu) ** 2, axis=-1, keepdims=True)
    xn = (x - mu) * lax.rsqrt(var + LN_EPS) * g_ref[...] + b_ref[...]

    # ---- GCNConv linear: z = xn @ W.T (w_ref is passed pre-transposed as (in, out)) ----
    z = jnp.dot(xn, w_ref[...], preferred_element_type=jnp.float32)

    # ---- block-diagonal dense adjacency from edge lists (iota one-hots + one MXU push) ----
    # A[i, j] = number of edges j -> i inside this block of graphs.
    # One-hots are exactly 0/1 -> bf16 operands with f32 accumulation are bit-exact and take
    # the native bf16 MXU path on all generations.
    ei = ei_ref[...]                                  # (2, EE) int32, block-local node ids
    node_ids = lax.broadcasted_iota(jnp.int32, (M, EE), 0)
    src_oh = (ei[0:1, :] == node_ids).astype(jnp.bfloat16)      # (M, EE)
    dst_oh = (ei[1:2, :] == node_ids).astype(jnp.bfloat16)      # (M, EE)
    a = lax.dot_general(dst_oh, src_oh, (((1,), (1,)), ((), ())),
                        preferred_element_type=jnp.float32)      # (M, M)

    # add_remaining_self_loops: weight-1 self loop only where the node has none yet.
    ii = lax.broadcasted_iota(jnp.int32, (M, M), 0)
    jj = lax.broadcasted_iota(jnp.int32, (M, M), 1)
    eye = (ii == jj).astype(jnp.float32)
    a = jnp.maximum(a, eye)

    # symmetric normalization D^-1/2 (A+I) D^-1/2 as two (M,1) row scalings (no (1,M) transpose).
    deg = jnp.sum(a, axis=-1, keepdims=True)                     # (M, 1), >= 1 due to self loops
    d_is = lax.rsqrt(deg)
    agg = jnp.dot(a, z * d_is, preferred_element_type=jnp.float32) * d_is
    h = agg + bias_ref[...]

    # ---- residual + ReLU ----
    o_ref[...] = jnp.maximum(x + h, 0.0)


def residual_graph_conv(x, edge_index, params, *, graphs_per_block=GB):
    """Batched forward of ResidualGraphConv: relu(x + GCNConv(LayerNorm(x), edge_index))."""
    Bn, n, H = x.shape
    Eg = edge_index.shape[-1]
    gb = min(graphs_per_block, Bn)
    assert Bn % gb == 0
    nblk = Bn // gb
    M, EE = gb * n, gb * Eg

    # Offset each graph's node ids by its position inside its block so the per-block dense
    # adjacency is block-diagonal (graphs never mix). Cheap int adds, no scatter. src & dst
    # are packed into ONE (nblk, 2, EE) array -> a single small DMA per grid step.
    pos = (jnp.arange(Bn, dtype=jnp.int32) % gb)[:, None, None] * n           # (B, 1, 1)
    ei = (edge_index.astype(jnp.int32) + pos)                                 # (B, 2, Eg)
    ei = ei.reshape(nblk, gb, 2, Eg).transpose(0, 2, 1, 3).reshape(nblk, 2, EE)
    x2d = x.reshape(Bn * n, H)

    # CostEstimate: adjacency contraction dominates (2*M*M*EE MACs), plus the two GCN matmuls.
    flops = nblk * (2 * M * M * EE + 2 * M * M * H + 2 * M * H * H)
    bytes_accessed = (x2d.size + Bn * n * H + ei.size + 3 * H + H * H) * 4

    out = pl.pallas_call(
        gcn_kernel,
        out_shape=jax.ShapeDtypeStruct((Bn * n, H), jnp.float32),
        grid=(nblk,),
        in_specs=[
            pl.BlockSpec((M, H), lambda c: (c, 0)),                 # x slab
            pl.BlockSpec((None, 2, EE), lambda c: (c, 0, 0)),       # packed (src,dst) ids
            pl.BlockSpec((1, H), lambda c: (0, 0)),                 # LN gamma
            pl.BlockSpec((1, H), lambda c: (0, 0)),                 # LN beta
            pl.BlockSpec((H, H), lambda c: (0, 0)),                 # GCN weight (in, out)
            pl.BlockSpec((1, H), lambda c: (0, 0)),                 # GCN bias
        ],
        out_specs=pl.BlockSpec((M, H), lambda c: (c, 0)),
        compiler_params=pltpu.CompilerParams(
            dimension_semantics=("parallel",)),                     # harmless at grid=(1,)
        cost_estimate=pl.CostEstimate(
            flops=flops, transcendentals=2 * nblk * M, bytes_accessed=bytes_accessed),
    )(x2d, ei, params["ln_g"], params["ln_b"], params["w"], params["b"])
    return out.reshape(Bn, n, H)


def reference(x, edge_index, params):
    """Pure-JAX reference of relu(x + GCNConv(LayerNorm(x), edge_index)), per graph."""
    outs = []
    for b in range(x.shape[0]):
        xb = x[b]
        mu = xb.mean(-1, keepdims=True)
        var = ((xb - mu) ** 2).mean(-1, keepdims=True)
        xn = (xb - mu) / jnp.sqrt(var + LN_EPS) * params["ln_g"] + params["ln_b"]
        z = xn @ params["w"]
        src, dst = edge_index[b, 0], edge_index[b, 1]
        a = jnp.zeros((N, N), jnp.float32).at[dst, src].add(1.0)
        a = jnp.maximum(a, jnp.eye(N, dtype=jnp.float32))
        d = 1.0 / jnp.sqrt(a.sum(-1, keepdims=True))
        h = (a @ (z * d)) * d + params["b"]
        outs.append(jnp.maximum(xb + h, 0.0))
    return jnp.stack(outs)


if __name__ == "__main__":
    key = jax.random.PRNGKey(0)
    k_x, k_w, k_b, k_s, k_d = jax.random.split(key, 5)

    s = math.sqrt(6.0 / (HIDDEN + HIDDEN))    # glorot bound for GCNConv.lin
    params = {
        "ln_g": jnp.ones((1, HIDDEN), jnp.float32),
        "ln_b": jnp.zeros((1, HIDDEN), jnp.float32),
        "w": jax.random.uniform(k_w, (HIDDEN, HIDDEN), jnp.float32, -s, s),   # (in, out) = W.T
        "b": 0.1 * jax.random.normal(k_b, (1, HIDDEN), jnp.float32),
    }

    x = jax.random.normal(k_x, (B, N, HIDDEN), jnp.float32)
    src = jax.random.randint(k_s, (B, 1, E), 0, N, dtype=jnp.int32)
    dst = jax.random.randint(k_d, (B, 1, E), 0, N, dtype=jnp.int32)
    edge_index = jnp.concatenate([src, dst], axis=1)               # (B, 2, E) = (src, dst)

    out = jax.block_until_ready(residual_graph_conv(x, edge_index, params))

    assert out.shape == (B, N, HIDDEN)
    assert bool(jnp.all(jnp.isfinite(out)))
    ref = reference(x, edge_index, params)
    assert bool(jnp.allclose(out, ref, rtol=1e-4, atol=1e-4)), float(jnp.max(jnp.abs(out - ref)))
    print("KERNEL_OK")
</pallas_src>

<mosaic_0001>
module attributes {stable_mosaic.version = 11 : i64} {
  func.func @gcn_kernel(%arg0: i32, %arg1: memref<128x32xf32, #tpu.memory_space<vmem>>, %arg2: memref<1x2x384xi32, #tpu.memory_space<vmem>>, %arg3: memref<1x32xf32, #tpu.memory_space<vmem>>, %arg4: memref<1x32xf32, #tpu.memory_space<vmem>>, %arg5: memref<32x32xf32, #tpu.memory_space<vmem>>, %arg6: memref<1x32xf32, #tpu.memory_space<vmem>>, %arg7: memref<128x32xf32, #tpu.memory_space<vmem>>) attributes {dimension_semantics = [#tpu.dimension_semantics<parallel>], iteration_bounds = array<i64: 1>, scalar_prefetch = 0 : i64, scratch_operands = 0 : i64, tpu.core_type = #tpu.core_type<tc>, window_params = [{transform_indices = @transform_0, window_bounds = array<i64: 128, 32>}, {transform_indices = @transform_1, window_bounds = array<i64: 1, 2, 384>}, {pipeline_mode = #tpu.pipeline_mode<synchronous>, transform_indices = @transform_2, window_bounds = array<i64: 1, 32>}, {pipeline_mode = #tpu.pipeline_mode<synchronous>, transform_indices = @transform_3, window_bounds = array<i64: 1, 32>}, {pipeline_mode = #tpu.pipeline_mode<synchronous>, transform_indices = @transform_4, window_bounds = array<i64: 32, 32>}, {pipeline_mode = #tpu.pipeline_mode<synchronous>, transform_indices = @transform_5, window_bounds = array<i64: 1, 32>}, {transform_indices = @transform_6, window_bounds = array<i64: 128, 32>}]} {
    %c0 = arith.constant 0 : index
    %c0_0 = arith.constant 0 : index
    %0 = vector.load %arg1[%c0, %c0_0] : memref<128x32xf32, #tpu.memory_space<vmem>>, vector<128x32xf32>
    %cst = arith.constant dense<0.000000e+00> : vector<128xf32>
    %1 = vector.multi_reduction <add>, %0, %cst [1] : vector<128x32xf32> to vector<128xf32>
    %2 = vector.shape_cast %1 : vector<128xf32> to vector<128x1xf32>
    %cst_1 = arith.constant 3.200000e+01 : f32
    %3 = vector.broadcast %cst_1 : f32 to vector<128x1xf32>
    %4 = arith.divf %2, %3 : vector<128x1xf32>
    %5 = vector.broadcast %4 : vector<128x1xf32> to vector<128x32xf32>
    %6 = arith.subf %0, %5 : vector<128x32xf32>
    %7 = arith.mulf %6, %6 : vector<128x32xf32>
    %cst_2 = arith.constant dense<0.000000e+00> : vector<128xf32>
    %8 = vector.multi_reduction <add>, %7, %cst_2 [1] : vector<128x32xf32> to vector<128xf32>
    %9 = vector.shape_cast %8 : vector<128xf32> to vector<128x1xf32>
    %cst_3 = arith.constant 3.200000e+01 : f32
    %10 = vector.broadcast %cst_3 : f32 to vector<128x1xf32>
    %11 = arith.divf %9, %10 : vector<128x1xf32>
    %12 = vector.broadcast %4 : vector<128x1xf32> to vector<128x32xf32>
    %13 = arith.subf %0, %12 : vector<128x32xf32>
    %cst_4 = arith.constant 9.99999974E-6 : f32
    %14 = vector.broadcast %cst_4 : f32 to vector<128x1xf32>
    %15 = arith.addf %11, %14 : vector<128x1xf32>
    %16 = math.rsqrt %15 : vector<128x1xf32>
    %17 = vector.broadcast %16 : vector<128x1xf32> to vector<128x32xf32>
    %18 = arith.mulf %13, %17 : vector<128x32xf32>
    %c0_5 = arith.constant 0 : index
    %c0_6 = arith.constant 0 : index
    %19 = vector.load %arg3[%c0_5, %c0_6] : memref<1x32xf32, #tpu.memory_space<vmem>>, vector<1x32xf32>
    %20 = vector.broadcast %19 : vector<1x32xf32> to vector<128x32xf32>
    %21 = arith.mulf %18, %20 : vector<128x32xf32>
    %c0_7 = arith.constant 0 : index
    %c0_8 = arith.constant 0 : index
    %22 = vector.load %arg4[%c0_7, %c0_8] : memref<1x32xf32, #tpu.memory_space<vmem>>, vector<1x32xf32>
    %23 = vector.broadcast %22 : vector<1x32xf32> to vector<128x32xf32>
    %24 = arith.addf %21, %23 : vector<128x32xf32>
    %c0_9 = arith.constant 0 : index
    %c0_10 = arith.constant 0 : index
    %25 = vector.load %arg5[%c0_9, %c0_10] : memref<32x32xf32, #tpu.memory_space<vmem>>, vector<32x32xf32>
    %cst_11 = arith.constant dense<0.000000e+00> : vector<128x32xf32>
    %26 = tpu.matmul %24, %25, %cst_11 {dimension_numbers = #tpu.dot_dimension_numbers<[1], [0], [0], [1], [0, 0, 1, 1], [], []>} : vector<128x32xf32>, vector<32x32xf32>, vector<128x32xf32> -> vector<128x32xf32>
    %c0_12 = arith.constant 0 : index
    %c0_13 = arith.constant 0 : index
    %c0_14 = arith.constant 0 : index
    %27 = vector.load %arg2[%c0_12, %c0_13, %c0_14] : memref<1x2x384xi32, #tpu.memory_space<vmem>>, vector<1x2x384xi32>
    %28 = vector.shape_cast %27 : vector<1x2x384xi32> to vector<2x384xi32>
    %29 = tpu.iota {dimensions = array<i32: 0>} : vector<128x384xi32>
    %30 = vector.extract_strided_slice %28 {offsets = [0, 0], sizes = [1, 384], strides = [1, 1]} : vector<2x384xi32> to vector<1x384xi32>
    %31 = vector.broadcast %30 : vector<1x384xi32> to vector<128x384xi32>
    %32 = arith.cmpi eq, %31, %29 : vector<128x384xi32>
    %33 = arith.extui %32 : vector<128x384xi1> to vector<128x384xi32>
    %34 = arith.sitofp %33 : vector<128x384xi32> to vector<128x384xf32>
    %35 = arith.truncf %34 : vector<128x384xf32> to vector<128x384xbf16>
    %36 = vector.extract_strided_slice %28 {offsets = [1, 0], sizes = [1, 384], strides = [1, 1]} : vector<2x384xi32> to vector<1x384xi32>
    %37 = vector.broadcast %36 : vector<1x384xi32> to vector<128x384xi32>
    %38 = arith.cmpi eq, %37, %29 : vector<128x384xi32>
    %39 = arith.extui %38 : vector<128x384xi1> to vector<128x384xi32>
    %40 = arith.sitofp %39 : vector<128x384xi32> to vector<128x384xf32>
    %41 = arith.truncf %40 : vector<128x384xf32> to vector<128x384xbf16>
    %cst_15 = arith.constant dense<0.000000e+00> : vector<128x128xf32>
    %42 = tpu.matmul %41, %35, %cst_15 {dimension_numbers = #tpu.dot_dimension_numbers<[1], [1], [0], [0], [0, 0, 1, 0], [], []>} : vector<128x384xbf16>, vector<128x384xbf16>, vector<128x128xf32> -> vector<128x128xf32>
    %43 = tpu.iota {dimensions = array<i32: 0>} : vector<128x128xi32>
    %44 = tpu.iota {dimensions = array<i32: 1>} : vector<128x128xi32>
    %45 = arith.cmpi eq, %43, %44 : vector<128x128xi32>
    %46 = arith.extui %45 : vector<128x128xi1> to vector<128x128xi32>
    %47 = arith.sitofp %46 : vector<128x128xi32> to vector<128x128xf32>
    %48 = arith.maximumf %42, %47 : vector<128x128xf32>
    %cst_16 = arith.constant dense<0.000000e+00> : vector<128xf32>
    %49 = vector.multi_reduction <add>, %48, %cst_16 [1] : vector<128x128xf32> to vector<128xf32>
    %50 = vector.shape_cast %49 : vector<128xf32> to vector<128x1xf32>
    %51 = math.rsqrt %50 : vector<128x1xf32>
    %52 = vector.broadcast %51 : vector<128x1xf32> to vector<128x32xf32>
    %53 = arith.mulf %26, %52 : vector<128x32xf32>
    %cst_17 = arith.constant dense<0.000000e+00> : vector<128x32xf32>
    %54 = tpu.matmul %48, %53, %cst_17 {dimension_numbers = #tpu.dot_dimension_numbers<[1], [0], [0], [1], [0, 0, 1, 1], [], []>} : vector<128x128xf32>, vector<128x32xf32>, vector<128x32xf32> -> vector<128x32xf32>
    %55 = vector.broadcast %51 : vector<128x1xf32> to vector<128x32xf32>
    %56 = arith.mulf %54, %55 : vector<128x32xf32>
    %c0_18 = arith.constant 0 : index
    %c0_19 = arith.constant 0 : index
    %57 = vector.load %arg6[%c0_18, %c0_19] : memref<1x32xf32, #tpu.memory_space<vmem>>, vector<1x32xf32>
    %58 = vector.broadcast %57 : vector<1x32xf32> to vector<128x32xf32>
    %59 = arith.addf %56, %58 : vector<128x32xf32>
    %60 = arith.addf %0, %59 : vector<128x32xf32>
    %cst_20 = arith.constant 0.000000e+00 : f32
    %61 = vector.broadcast %cst_20 : f32 to vector<128x32xf32>
    %62 = arith.maximumf %60, %61 : vector<128x32xf32>
    %c0_21 = arith.constant 0 : index
    %c0_22 = arith.constant 0 : index
    %63 = vector.load %arg7[%c0_21, %c0_22] : memref<128x32xf32, #tpu.memory_space<vmem>>, vector<128x32xf32>
    tpu.vector_store %arg7[%c0_21, %c0_22], %62 {strides = array<i32>} : memref<128x32xf32, #tpu.memory_space<vmem>>, vector<128x32xf32>,
    return
  }
  func.func @transform_0(%arg0: i32) -> (i32, i32) {
    %c0_i32 = arith.constant 0 : i32
    %c0_i32_0 = arith.constant 0 : i32
    return %arg0, %c0_i32 : i32, i32
  }
  func.func @transform_1(%arg0: i32) -> (i32, i32, i32) {
    %c0_i32 = arith.constant 0 : i32
    %c0_i32_0 = arith.constant 0 : i32
    %c0_i32_1 = arith.constant 0 : i32
    return %arg0, %c0_i32, %c0_i32_0 : i32, i32, i32
  }
  func.func @transform_2(%arg0: i32) -> (i32, i32) {
    %c0_i32 = arith.constant 0 : i32
    %c0_i32_0 = arith.constant 0 : i32
    %c0_i32_1 = arith.constant 0 : i32
    return %c0_i32, %c0_i32_0 : i32, i32
  }
  func.func @transform_3(%arg0: i32) -> (i32, i32) {
    %c0_i32 = arith.constant 0 : i32
    %c0_i32_0 = arith.constant 0 : i32
    %c0_i32_1 = arith.constant 0 : i32
    return %c0_i32, %c0_i32_0 : i32, i32
  }
  func.func @transform_4(%arg0: i32) -> (i32, i32) {
    %c0_i32 = arith.constant 0 : i32
    %c0_i32_0 = arith.constant 0 : i32
    %c0_i32_1 = arith.constant 0 : i32
    return %c0_i32, %c0_i32_0 : i32, i32
  }
  func.func @transform_5(%arg0: i32) -> (i32, i32) {
    %c0_i32 = arith.constant 0 : i32
    %c0_i32_0 = arith.constant 0 : i32
    %c0_i32_1 = arith.constant 0 : i32
    return %c0_i32, %c0_i32_0 : i32, i32
  }
  func.func @transform_6(%arg0: i32) -> (i32, i32) {
    %c0_i32 = arith.constant 0 : i32
    %c0_i32_0 = arith.constant 0 : i32
    return %arg0, %c0_i32 : i32, i32
  }
}

</mosaic_0001>

<llo_original>
// kernel: tpu_custom_call.1
$region0: #{tpu_custom_call.1}
  #allocation0 [shape = 'u32[]', space=smem, size = 0x4, offset = 0x4, fixed_abs, tag = 'smem constant byte address 0x4 - core index']
  #allocation1 [shape = 'u32[144,128]{1,0:T(1,128)}', space=vmem, size = 0x12000, scoped, tag = 'internal scratch']
  %s0 = inlined_call_operand.vmem [shape: f32[128,32], index: 0, kind: input, shape index: {}]
  %s1 = inlined_call_operand.vmem [shape: s32[1,2,384], index: 1, kind: input, shape index: {}]
  %s2 = inlined_call_operand.vmem [shape: f32[1,32], index: 2, kind: input, shape index: {}]
  %s3 = inlined_call_operand.vmem [shape: f32[1,32], index: 3, kind: input, shape index: {}]
  %s4 = inlined_call_operand.vmem [shape: f32[32,32], index: 4, kind: input, shape index: {}]
  %s5 = inlined_call_operand.vmem [shape: f32[1,32], index: 5, kind: input, shape index: {}]
  %s6 = inlined_call_operand.vmem [shape: f32[128,32], index: 6, kind: output, shape index: {}]
  %s7 = sld [smem:[#allocation0]]
  $region34: #{tpu_custom_call.1} parent=0
    _
  %s9 = ssub.s32 1, %s7
  %s10 = scalar_select 0, %s9, %s7
  // Predicated region
  $region2: #{tpu_custom_call.1} parent=0 // pred_check
    _
  $region3: #{tpu_custom_call.1} parent=0 // pred_check_branch
    %12 = sbr.rel (0) target = $region5
  $region4: #{tpu_custom_call.1} parent=0 // pred_region
    _
  $region5: #{tpu_custom_call.1} parent=0 // pred_fallthru
    _
  // Predicated region
  $region6: #{tpu_custom_call.1} parent=0 // pred_check
    _
  $region7: #{tpu_custom_call.1} parent=0 // pred_check_branch
    %14 = sbr.rel (0) target = $region9
  $region8: #{tpu_custom_call.1} parent=0 // pred_region
    _
  $region9: #{tpu_custom_call.1} parent=0 // pred_fallthru
    _
  // Predicated region
  $region10: #{tpu_custom_call.1} parent=0 // pred_check
    _
  $region11: #{tpu_custom_call.1} parent=0 // pred_check_branch
    %16 = sbr.rel (0) target = $region13
  $region12: #{tpu_custom_call.1} parent=0 // pred_region
    _
  $region13: #{tpu_custom_call.1} parent=0 // pred_fallthru
    _
  // Predicated region
  $region14: #{tpu_custom_call.1} parent=0 // pred_check
    _
  $region15: #{tpu_custom_call.1} parent=0 // pred_check_branch
    %18 = sbr.rel (0) target = $region17
  $region16: #{tpu_custom_call.1} parent=0 // pred_region
    _
  $region17: #{tpu_custom_call.1} parent=0 // pred_fallthru
    _
  // Predicated region
  $region18: #{tpu_custom_call.1} parent=0 // pred_check
    _
  $region19: #{tpu_custom_call.1} parent=0 // pred_check_branch
    %20 = sbr.rel (0) target = $region21
  $region20: #{tpu_custom_call.1} parent=0 // pred_region
    _
  $region21: #{tpu_custom_call.1} parent=0 // pred_fallthru
    _
  // Predicated region
  $region22: #{tpu_custom_call.1} parent=0 // pred_check
    _
  $region23: #{tpu_custom_call.1} parent=0 // pred_check_branch
    %22 = sbr.rel (0) target = $region25
  $region24: #{tpu_custom_call.1} parent=0 // pred_region
    _
  $region25: #{tpu_custom_call.1} parent=0 // pred_fallthru
    _
  %v24 = vld [vmem:[%s0] sm:$0xff]
  %v25 = vld [vmem:[%s0 + $0x8] sm:$0xff]
  %v26 = vld [vmem:[%s0 + $0x10] sm:$0xff]
  %v27 = vld [vmem:[%s0 + $0x18] sm:$0xff]
  %v28 = vld [vmem:[%s0 + $0x20] sm:$0xff]
  %v29 = vld [vmem:[%s0 + $0x28] sm:$0xff]
  %v30 = vld [vmem:[%s0 + $0x30] sm:$0xff]
  %v31 = vld [vmem:[%s0 + $0x38] sm:$0xff]
  %v32 = vld [vmem:[%s0 + $0x40] sm:$0xff]
  %v33 = vld [vmem:[%s0 + $0x48] sm:$0xff]
  %v34 = vld [vmem:[%s0 + $0x50] sm:$0xff]
  %v35 = vld [vmem:[%s0 + $0x58] sm:$0xff]
  %v36 = vld [vmem:[%s0 + $0x60] sm:$0xff]
  %v37 = vld [vmem:[%s0 + $0x68] sm:$0xff]
  %v38 = vld [vmem:[%s0 + $0x70] sm:$0xff]
  %v39 = vld [vmem:[%s0 + $0x78] sm:$0xff]
  %vm40 = vcmask 261120
  %v41 = vsel %vm40, %v24, 0.0
  %42 = vadd.xlane.f32.xlu0 %v41
  %v43 = vpop.xlane.xlu0 %42
  %v44 = vsel %vm40, %v25, 0.0
  %45 = vadd.xlane.f32.xlu0 %v44
  %v46 = vpop.xlane.xlu0 %45
  %v47 = vsel %vm40, %v26, 0.0
  %48 = vadd.xlane.f32.xlu0 %v47
  %v49 = vpop.xlane.xlu0 %48
  %v50 = vsel %vm40, %v27, 0.0
  %51 = vadd.xlane.f32.xlu0 %v50
  %v52 = vpop.xlane.xlu0 %51
  %v53 = vsel %vm40, %v28, 0.0
  %54 = vadd.xlane.f32.xlu0 %v53
  %v55 = vpop.xlane.xlu0 %54
  %v56 = vsel %vm40, %v29, 0.0
  %57 = vadd.xlane.f32.xlu0 %v56
  %v58 = vpop.xlane.xlu0 %57
  %v59 = vsel %vm40, %v30, 0.0
  %60 = vadd.xlane.f32.xlu0 %v59
  %v61 = vpop.xlane.xlu0 %60
  %v62 = vsel %vm40, %v31, 0.0
  %63 = vadd.xlane.f32.xlu0 %v62
  %v64 = vpop.xlane.xlu0 %63
  %v65 = vsel %vm40, %v32, 0.0
  %66 = vadd.xlane.f32.xlu0 %v65
  %v67 = vpop.xlane.xlu0 %66
  %v68 = vsel %vm40, %v33, 0.0
  %69 = vadd.xlane.f32.xlu0 %v68
  %v70 = vpop.xlane.xlu0 %69
  %v71 = vsel %vm40, %v34, 0.0
  %72 = vadd.xlane.f32.xlu0 %v71
  %v73 = vpop.xlane.xlu0 %72
  %v74 = vsel %vm40, %v35, 0.0
  %75 = vadd.xlane.f32.xlu0 %v74
  %v76 = vpop.xlane.xlu0 %75
  %v77 = vsel %vm40, %v36, 0.0
  %78 = vadd.xlane.f32.xlu0 %v77
  %v79 = vpop.xlane.xlu0 %78
  %v80 = vsel %vm40, %v37, 0.0
  %81 = vadd.xlane.f32.xlu0 %v80
  %v82 = vpop.xlane.xlu0 %81
  %v83 = vsel %vm40, %v38, 0.0
  %84 = vadd.xlane.f32.xlu0 %v83
  %v85 = vpop.xlane.xlu0 %84
  %v86 = vsel %vm40, %v39, 0.0
  %87 = vadd.xlane.f32.xlu0 %v86
  %v88 = vpop.xlane.xlu0 %87
  %v89 = vrcp.pop 32.0
  %v90 = vmul.f32 %v43, %v89
  %v91 = vmul.f32 %v46, %v89
  %v92 = vmul.f32 %v49, %v89
  %v93 = vmul.f32 %v52, %v89
  %v94 = vmul.f32 %v55, %v89
  %v95 = vmul.f32 %v58, %v89
  %v96 = vmul.f32 %v61, %v89
  %v97 = vmul.f32 %v64, %v89
  %v98 = vmul.f32 %v67, %v89
  %v99 = vmul.f32 %v70, %v89
  %v100 = vmul.f32 %v73, %v89
  %v101 = vmul.f32 %v76, %v89
  %v102 = vmul.f32 %v79, %v89
  %v103 = vmul.f32 %v82, %v89
  %v104 = vmul.f32 %v85, %v89
  %v105 = vmul.f32 %v88, %v89
  %v106 = vsub.f32 %v24, %v90
  %v107 = vsub.f32 %v25, %v91
  %v108 = vsub.f32 %v26, %v92
  %v109 = vsub.f32 %v27, %v93
  %v110 = vsub.f32 %v28, %v94
  %v111 = vsub.f32 %v29, %v95
  %v112 = vsub.f32 %v30, %v96
  %v113 = vsub.f32 %v31, %v97
  %v114 = vsub.f32 %v32, %v98
  %v115 = vsub.f32 %v33, %v99
  %v116 = vsub.f32 %v34, %v100
  %v117 = vsub.f32 %v35, %v101
  %v118 = vsub.f32 %v36, %v102
  %v119 = vsub.f32 %v37, %v103
  %v120 = vsub.f32 %v38, %v104
  %v121 = vsub.f32 %v39, %v105
  %v122 = vmul.f32 %v106, %v106
  %v123 = vmul.f32 %v107, %v107
  %v124 = vmul.f32 %v108, %v108
  %v125 = vmul.f32 %v109, %v109
  %v126 = vmul.f32 %v110, %v110
  %v127 = vmul.f32 %v111, %v111
  %v128 = vmul.f32 %v112, %v112
  %v129 = vmul.f32 %v113, %v113
  %v130 = vmul.f32 %v114, %v114
  %v131 = vmul.f32 %v115, %v115
  %v132 = vmul.f32 %v116, %v116
  %v133 = vmul.f32 %v117, %v117
  %v134 = vmul.f32 %v118, %v118
  %v135 = vmul.f32 %v119, %v119
  %v136 = vmul.f32 %v120, %v120
  %v137 = vmul.f32 %v121, %v121
  %v138 = vsel %vm40, %v122, 0.0
  %139 = vadd.xlane.f32.xlu0 %v138
  %v140 = vpop.xlane.xlu0 %139
  %v141 = vsel %vm40, %v123, 0.0
  %142 = vadd.xlane.f32.xlu0 %v141
  %v143 = vpop.xlane.xlu0 %142
  %v144 = vsel %vm40, %v124, 0.0
  %145 = vadd.xlane.f32.xlu0 %v144
  %v146 = vpop.xlane.xlu0 %145
  %v147 = vsel %vm40, %v125, 0.0
  %148 = vadd.xlane.f32.xlu0 %v147
  %v149 = vpop.xlane.xlu0 %148
  %v150 = vsel %vm40, %v126, 0.0
  %151 = vadd.xlane.f32.xlu0 %v150
  %v152 = vpop.xlane.xlu0 %151
  %v153 = vsel %vm40, %v127, 0.0
  %154 = vadd.xlane.f32.xlu0 %v153
  %v155 = vpop.xlane.xlu0 %154
  %v156 = vsel %vm40, %v128, 0.0
  %157 = vadd.xlane.f32.xlu0 %v156
  %v158 = vpop.xlane.xlu0 %157
  %v159 = vsel %vm40, %v129, 0.0
  %160 = vadd.xlane.f32.xlu0 %v159
  %v161 = vpop.xlane.xlu0 %160
  %v162 = vsel %vm40, %v130, 0.0
  %163 = vadd.xlane.f32.xlu0 %v162
  %v164 = vpop.xlane.xlu0 %163
  %v165 = vsel %vm40, %v131, 0.0
  %166 = vadd.xlane.f32.xlu0 %v165
  %v167 = vpop.xlane.xlu0 %166
  %v168 = vsel %vm40, %v132, 0.0
  %169 = vadd.xlane.f32.xlu0 %v168
  %v170 = vpop.xlane.xlu0 %169
  %v171 = vsel %vm40, %v133, 0.0
  %172 = vadd.xlane.f32.xlu0 %v171
  %v173 = vpop.xlane.xlu0 %172
  %v174 = vsel %vm40, %v134, 0.0
  %175 = vadd.xlane.f32.xlu0 %v174
  %v176 = vpop.xlane.xlu0 %175
  %v177 = vsel %vm40, %v135, 0.0
  %178 = vadd.xlane.f32.xlu0 %v177
  %v179 = vpop.xlane.xlu0 %178
  %v180 = vsel %vm40, %v136, 0.0
  %181 = vadd.xlane.f32.xlu0 %v180
  %v182 = vpop.xlane.xlu0 %181
  %v183 = vsel %vm40, %v137, 0.0
  %184 = vadd.xlane.f32.xlu0 %v183
  %v185 = vpop.xlane.xlu0 %184
  %v186 = vmul.f32 %v140, %v89
  %v187 = vmul.f32 %v143, %v89
  %v188 = vmul.f32 %v146, %v89
  %v189 = vmul.f32 %v149, %v89
  %v190 = vmul.f32 %v152, %v89
  %v191 = vmul.f32 %v155, %v89
  %v192 = vmul.f32 %v158, %v89
  %v193 = vmul.f32 %v161, %v89
  %v194 = vmul.f32 %v164, %v89
  %v195 = vmul.f32 %v167, %v89
  %v196 = vmul.f32 %v170, %v89
  %v197 = vmul.f32 %v173, %v89
  %v198 = vmul.f32 %v176, %v89
  %v199 = vmul.f32 %v179, %v89
  %v200 = vmul.f32 %v182, %v89
  %v201 = vmul.f32 %v185, %v89
  %v202 = vadd.f32 %v186, 1e-05
  %v203 = vadd.f32 %v187, 1e-05
  %v204 = vadd.f32 %v188, 1e-05
  %v205 = vadd.f32 %v189, 1e-05
  %v206 = vadd.f32 %v190, 1e-05
  %v207 = vadd.f32 %v191, 1e-05
  %v208 = vadd.f32 %v192, 1e-05
  %v209 = vadd.f32 %v193, 1e-05
  %v210 = vadd.f32 %v194, 1e-05
  %v211 = vadd.f32 %v195, 1e-05
  %v212 = vadd.f32 %v196, 1e-05
  %v213 = vadd.f32 %v197, 1e-05
  %v214 = vadd.f32 %v198, 1e-05
  %v215 = vadd.f32 %v199, 1e-05
  %v216 = vadd.f32 %v200, 1e-05
  %v217 = vadd.f32 %v201, 1e-05
  %v218 = vrsqrt.pop %v202
  %v219 = vrsqrt.pop %v203
  %v220 = vrsqrt.pop %v204
  %v221 = vrsqrt.pop %v205
  %v222 = vrsqrt.pop %v206
  %v223 = vrsqrt.pop %v207
  %v224 = vrsqrt.pop %v208
  %v225 = vrsqrt.pop %v209
  %v226 = vrsqrt.pop %v210
  %v227 = vrsqrt.pop %v211
  %v228 = vrsqrt.pop %v212
  %v229 = vrsqrt.pop %v213
  %v230 = vrsqrt.pop %v214
  %v231 = vrsqrt.pop %v215
  %v232 = vrsqrt.pop %v216
  %v233 = vrsqrt.pop %v217
  %v234 = vmul.f32 %v106, %v218
  %v235 = vmul.f32 %v107, %v219
  %v236 = vmul.f32 %v108, %v220
  %v237 = vmul.f32 %v109, %v221
  %v238 = vmul.f32 %v110, %v222
  %v239 = vmul.f32 %v111, %v223
  %v240 = vmul.f32 %v112, %v224
  %v241 = vmul.f32 %v113, %v225
  %v242 = vmul.f32 %v114, %v226
  %v243 = vmul.f32 %v115, %v227
  %v244 = vmul.f32 %v116, %v228
  %v245 = vmul.f32 %v117, %v229
  %v246 = vmul.f32 %v118, %v230
  %v247 = vmul.f32 %v119, %v231
  %v248 = vmul.f32 %v120, %v232
  %v249 = vmul.f32 %v121, %v233
  %v250 = vld [vmem:[%s2] sm:$0x1]
  %v252 = vlaneseq
  %v253 = vshrl.u32 %v252, 7
  %v254 = vsub.s32 0, %v253
  %v255 = vrot.slane %v250, %v254
  %v257 = vmul.f32 %v234, %v255
  %v258 = vmul.f32 %v235, %v255
  %v259 = vmul.f32 %v236, %v255
  %v260 = vmul.f32 %v237, %v255
  %v261 = vmul.f32 %v238, %v255
  %v262 = vmul.f32 %v239, %v255
  %v263 = vmul.f32 %v240, %v255
  %v264 = vmul.f32 %v241, %v255
  %v265 = vmul.f32 %v242, %v255
  %v266 = vmul.f32 %v243, %v255
  %v267 = vmul.f32 %v244, %v255
  %v268 = vmul.f32 %v245, %v255
  %v269 = vmul.f32 %v246, %v255
  %v270 = vmul.f32 %v247, %v255
  %v271 = vmul.f32 %v248, %v255
  %v272 = vmul.f32 %v249, %v255
  %v273 = vld [vmem:[%s3] sm:$0x1]
  %v275 = vlaneseq
  %v276 = vshrl.u32 %v275, 7
  %v277 = vsub.s32 0, %v276
  %v278 = vrot.slane %v273, %v277
  %v280 = vadd.f32 %v257, %v278
  %v281 = vadd.f32 %v258, %v278
  %v282 = vadd.f32 %v259, %v278
  %v283 = vadd.f32 %v260, %v278
  %v284 = vadd.f32 %v261, %v278
  %v285 = vadd.f32 %v262, %v278
  %v286 = vadd.f32 %v263, %v278
  %v287 = vadd.f32 %v264, %v278
  %v288 = vadd.f32 %v265, %v278
  %v289 = vadd.f32 %v266, %v278
  %v290 = vadd.f32 %v267, %v278
  %v291 = vadd.f32 %v268, %v278
  %v292 = vadd.f32 %v269, %v278
  %v293 = vadd.f32 %v270, %v278
  %v294 = vadd.f32 %v271, %v278
  %v295 = vadd.f32 %v272, %v278
  %v296 = vld [vmem:[%s4] sm:$0xff]
  %v297 = vld [vmem:[%s4 + $0x8] sm:$0xff]
  %v298 = vld [vmem:[%s4 + $0x10] sm:$0xff]
  %v299 = vld [vmem:[%s4 + $0x18] sm:$0xff]
  %v301 = vsel %vm40, %v280, 0
  %v304 = vsel %vm40, %v281, 0
  %v307 = vsel %vm40, %v282, 0
  %v310 = vsel %vm40, %v283, 0
  %v313 = vsel %vm40, %v284, 0
  %v316 = vsel %vm40, %v285, 0
  %v319 = vsel %vm40, %v286, 0
  %v322 = vsel %vm40, %v287, 0
  %v325 = vsel %vm40, %v288, 0
  %v328 = vsel %vm40, %v289, 0
  %v331 = vsel %vm40, %v290, 0
  %v334 = vsel %vm40, %v291, 0
  %v337 = vsel %vm40, %v292, 0
  %v340 = vsel %vm40, %v293, 0
  %v343 = vsel %vm40, %v294, 0
  %v346 = vsel %vm40, %v295, 0
  %348 = vmatprep.subr.mxu0 0.0
  %349 = vmatpush1.msra.mxu0 %v296
  %350 = vmatprep.subr.mxu0 0.0
  %351 = vmatpush1.msra.mxu0 %v297
  %352 = vmatprep.subr.mxu0 0.0
  %353 = vmatpush1.msra.mxu0 %v298
  %354 = vmatprep.subr.mxu0 0.0
  %355 = vmatpush1.msra.mxu0 %v299
  %356 = vmatprep.subr.mxu0 0.0
  %357 = vmatpush1.msra.mxu0 0.0
  %358 = vmatprep.subr.mxu0 0.0
  %359 = vmatpush1.msra.mxu0 0.0
  %360 = vmatprep.subr.mxu0 0.0
  %361 = vmatpush1.msra.mxu0 0.0
  %362 = vmatprep.subr.mxu0 0.0
  %363 = vmatpush1.msra.mxu0 0.0
  %364 = vmatprep.subr.mxu0 0.0
  %365 = vmatpush1.msra.mxu0 0.0
  %366 = vmatprep.subr.mxu0 0.0
  %367 = vmatpush1.msra.mxu0 0.0
  %368 = vmatprep.subr.mxu0 0.0
  %369 = vmatpush1.msra.mxu0 0.0
  %370 = vmatprep.subr.mxu0 0.0
  %371 = vmatpush1.msra.mxu0 0.0
  %372 = vmatprep.subr.mxu0 0.0
  %373 = vmatpush1.msra.mxu0 0.0
  %374 = vmatprep.subr.mxu0 0.0
  %375 = vmatpush1.msra.mxu0 0.0
  %376 = vmatprep.subr.mxu0 0.0
  %377 = vmatpush1.msra.mxu0 0.0
  %378 = vmatprep.subr.mxu0 0.0
  %379 = vmatpush1.msra.mxu0 0.0
  %380 = vmatprep.subr.mxu0 0.0
  %381 = vmatpush1.msra.mxu0 0.0
  %382 = vmatprep.subr.mxu0 0.0
  %383 = vmatpush1.msra.mxu0 0.0
  %384 = vmatprep.subr.mxu0 0.0
  %385 = vmatpush1.msra.mxu0 0.0
  %386 = vmatprep.subr.mxu0 0.0
  %387 = vmatpush1.msra.mxu0 0.0
  %388 = vmatprep.subr.mxu0 0.0
  %389 = vmatpush1.msra.mxu0 0.0
  %390 = vmatprep.subr.mxu0 0.0
  %391 = vmatpush1.msra.mxu0 0.0
  %392 = vmatprep.subr.mxu0 0.0
  %393 = vmatpush1.msra.mxu0 0.0
  %394 = vmatprep.subr.mxu0 0.0
  %395 = vmatpush1.msra.mxu0 0.0
  %396 = vmatprep.subr.mxu0 0.0
  %397 = vmatpush1.msra.mxu0 0.0
  %398 = vmatprep.subr.mxu0 0.0
  %399 = vmatpush1.msra.mxu0 0.0
  %400 = vmatprep.subr.mxu0 0.0
  %401 = vmatpush1.msra.mxu0 0.0
  %402 = vmatprep.subr.mxu0 0.0
  %403 = vmatpush1.msra.mxu0 0.0
  %404 = vmatprep.subr.mxu0 0.0
  %405 = vmatpush1.msra.mxu0 0.0
  %406 = vmatprep.subr.mxu0 0.0
  %407 = vmatpush1.msra.mxu0 0.0
  %408 = vmatprep.subr.mxu0 0.0
  %409 = vmatpush1.msra.mxu0 0.0
  %410 = vmatprep.subr.mxu0 0.0
  %411 = vmatpush1.msra.mxu0 0.0
  %412 = vmatprep.mubr.f32.mxu0 0.0
  %413 = vmatmul.mubr.f32.gmra.mrb[0].mxu0 %v301
  %v414 = vpop.f32.mrb[0].mxu0
  %v415 = vadd.f32 0.0, %v414
  %v416 = vpop.f32.mrb[0].mxu0
  %417 = vmatprep.mubr.f32.mxu0 0.0
  %418 = vmatmul.mubr.f32.gmra.mrb[0].mxu0 %v304
  %v419 = vpop.f32.mrb[0].mxu0
  %v420 = vadd.f32 0.0, %v419
  %v421 = vpop.f32.mrb[0].mxu0
  %422 = vmatprep.mubr.f32.mxu0 0.0
  %423 = vmatmul.mubr.f32.gmra.mrb[0].mxu0 %v307
  %v424 = vpop.f32.mrb[0].mxu0
  %v425 = vadd.f32 0.0, %v424
  %v426 = vpop.f32.mrb[0].mxu0
  %427 = vmatprep.mubr.f32.mxu0 0.0
  %428 = vmatmul.mubr.f32.gmra.mrb[0].mxu0 %v310
  %v429 = vpop.f32.mrb[0].mxu0
  %v430 = vadd.f32 0.0, %v429
  %v431 = vpop.f32.mrb[0].mxu0
  %432 = vmatprep.mubr.f32.mxu0 0.0
  %433 = vmatmul.mubr.f32.gmra.mrb[0].mxu0 %v313
  %v434 = vpop.f32.mrb[0].mxu0
  %v435 = vadd.f32 0.0, %v434
  %v436 = vpop.f32.mrb[0].mxu0
  %437 = vmatprep.mubr.f32.mxu0 0.0
  %438 = vmatmul.mubr.f32.gmra.mrb[0].mxu0 %v316
  %v439 = vpop.f32.mrb[0].mxu0
  %v440 = vadd.f32 0.0, %v439
  %v441 = vpop.f32.mrb[0].mxu0
  %442 = vmatprep.mubr.f32.mxu0 0.0
  %443 = vmatmul.mubr.f32.gmra.mrb[0].mxu0 %v319
  %v444 = vpop.f32.mrb[0].mxu0
  %v445 = vadd.f32 0.0, %v444
  %v446 = vpop.f32.mrb[0].mxu0
  %447 = vmatprep.mubr.f32.mxu0 0.0
  %448 = vmatmul.mubr.f32.gmra.mrb[0].mxu0 %v322
  %v449 = vpop.f32.mrb[0].mxu0
  %v450 = vadd.f32 0.0, %v449
  %v451 = vpop.f32.mrb[0].mxu0
  %452 = vmatprep.mubr.f32.mxu0 0.0
  %453 = vmatmul.mubr.f32.gmra.mrb[0].mxu0 %v325
  %v454 = vpop.f32.mrb[0].mxu0
  %v455 = vadd.f32 0.0, %v454
  %v456 = vpop.f32.mrb[0].mxu0
  %457 = vmatprep.mubr.f32.mxu0 0.0
  %458 = vmatmul.mubr.f32.gmra.mrb[0].mxu0 %v328
  %v459 = vpop.f32.mrb[0].mxu0
  %v460 = vadd.f32 0.0, %v459
  %v461 = vpop.f32.mrb[0].mxu0
  %462 = vmatprep.mubr.f32.mxu0 0.0
  %463 = vmatmul.mubr.f32.gmra.mrb[0].mxu0 %v331
  %v464 = vpop.f32.mrb[0].mxu0
  %v465 = vadd.f32 0.0, %v464
  %v466 = vpop.f32.mrb[0].mxu0
  %467 = vmatprep.mubr.f32.mxu0 0.0
  %468 = vmatmul.mubr.f32.gmra.mrb[0].mxu0 %v334
  %v469 = vpop.f32.mrb[0].mxu0
  %v470 = vadd.f32 0.0, %v469
  %v471 = vpop.f32.mrb[0].mxu0
  %472 = vmatprep.mubr.f32.mxu0 0.0
  %473 = vmatmul.mubr.f32.gmra.mrb[0].mxu0 %v337
  %v474 = vpop.f32.mrb[0].mxu0
  %v475 = vadd.f32 0.0, %v474
  %v476 = vpop.f32.mrb[0].mxu0
  %477 = vmatprep.mubr.f32.mxu0 0.0
  %478 = vmatmul.mubr.f32.gmra.mrb[0].mxu0 %v340
  %v479 = vpop.f32.mrb[0].mxu0
  %v480 = vadd.f32 0.0, %v479
  %v481 = vpop.f32.mrb[0].mxu0
  %482 = vmatprep.mubr.f32.mxu0 0.0
  %483 = vmatmul.mubr.f32.gmra.mrb[0].mxu0 %v343
  %v484 = vpop.f32.mrb[0].mxu0
  %v485 = vadd.f32 0.0, %v484
  %v486 = vpop.f32.mrb[0].mxu0
  %487 = vmatprep.mubr.f32.mxu0 0.0
  %488 = vmatmul.mubr.f32.gmra.mrb[0].mxu0 %v346
  %v489 = vpop.f32.mrb[0].mxu0
  %v490 = vadd.f32 0.0, %v489
  %v491 = vpop.f32.mrb[0].mxu0
  %492 = vdwg.mxu0
  %v493 = vld [vmem:[%s1] sm:$0x3f]
  %v494 = vlaneseq
  %v495 = vshrl.u32 %v494, 7
  %v496 = vadd.s32 %v495, 8
  %v497 = vadd.s32 %v495, 16
  %v498 = vadd.s32 %v495, 24
  %v499 = vadd.s32 %v495, 32
  %v500 = vadd.s32 %v495, 40
  %v501 = vadd.s32 %v495, 48
  %v502 = vadd.s32 %v495, 56
  %v503 = vadd.s32 %v495, 64
  %v504 = vadd.s32 %v495, 72
  %v505 = vadd.s32 %v495, 80
  %v506 = vadd.s32 %v495, 88
  %v507 = vadd.s32 %v495, 96
  %v508 = vadd.s32 %v495, 104
  %v509 = vadd.s32 %v495, 112
  %v510 = vadd.s32 %v495, 120
  %v511 = vlaneseq
  %v512 = vshrl.u32 %v511, 7
  %v513 = vsub.s32 0, %v512
  %v514 = vrot.slane %v493, %v513
  %v515 = vlaneseq
  %v516 = vshrl.u32 %v515, 7
  %v517 = vsub.s32 2, %v516
  %v518 = vrot.slane %v493, %v517
  %v519 = vlaneseq
  %v520 = vshrl.u32 %v519, 7
  %v521 = vsub.s32 4, %v520
  %v522 = vrot.slane %v493, %v521
  %v523 = vlaneseq
  %v524 = vshrl.u32 %v523, 7
  %v525 = vsub.s32 0, %v524
  %v526 = vrot.slane %v514, %v525
  %v527 = vlaneseq
  %v528 = vshrl.u32 %v527, 7
  %v529 = vsub.s32 0, %v528
  %v530 = vrot.slane %v518, %v529
  %v531 = vlaneseq
  %v532 = vshrl.u32 %v531, 7
  %v533 = vsub.s32 0, %v532
  %v534 = vrot.slane %v522, %v533
  %vm535 = vcmp.eq.s32.totalorder %v526, %v495
  %vm536 = vcmp.eq.s32.totalorder %v530, %v495
  %vm537 = vcmp.eq.s32.totalorder %v534, %v495
  %vm538 = vcmp.eq.s32.totalorder %v526, %v496
  %vm539 = vcmp.eq.s32.totalorder %v530, %v496
  %vm540 = vcmp.eq.s32.totalorder %v534, %v496
  %vm541 = vcmp.eq.s32.totalorder %v526, %v497
  %vm542 = vcmp.eq.s32.totalorder %v530, %v497
  %vm543 = vcmp.eq.s32.totalorder %v534, %v497
  %vm544 = vcmp.eq.s32.totalorder %v526, %v498
  %vm545 = vcmp.eq.s32.totalorder %v530, %v498
  %vm546 = vcmp.eq.s32.totalorder %v534, %v498
  %vm547 = vcmp.eq.s32.totalorder %v526, %v499
  %vm548 = vcmp.eq.s32.totalorder %v530, %v499
  %vm549 = vcmp.eq.s32.totalorder %v534, %v499
  %vm550 = vcmp.eq.s32.totalorder %v526, %v500
  %vm551 = vcmp.eq.s32.totalorder %v530, %v500
  %vm552 = vcmp.eq.s32.totalorder %v534, %v500
  %vm553 = vcmp.eq.s32.totalorder %v526, %v501
  %vm554 = vcmp.eq.s32.totalorder %v530, %v501
  %vm555 = vcmp.eq.s32.totalorder %v534, %v501
  %vm556 = vcmp.eq.s32.totalorder %v526, %v502
  %vm557 = vcmp.eq.s32.totalorder %v530, %v502
  %vm558 = vcmp.eq.s32.totalorder %v534, %v502
  %vm559 = vcmp.eq.s32.totalorder %v526, %v503
  %vm560 = vcmp.eq.s32.totalorder %v530, %v503
  %vm561 = vcmp.eq.s32.totalorder %v534, %v503
  %vm562 = vcmp.eq.s32.totalorder %v526, %v504
  %vm563 = vcmp.eq.s32.totalorder %v530, %v504
  %vm564 = vcmp.eq.s32.totalorder %v534, %v504
  %vm565 = vcmp.eq.s32.totalorder %v526, %v505
  %vm566 = vcmp.eq.s32.totalorder %v530, %v505
  %vm567 = vcmp.eq.s32.totalorder %v534, %v505
  %vm568 = vcmp.eq.s32.totalorder %v526, %v506
  %vm569 = vcmp.eq.s32.totalorder %v530, %v506
  %vm570 = vcmp.eq.s32.totalorder %v534, %v506
  %vm571 = vcmp.eq.s32.totalorder %v526, %v507
  %vm572 = vcmp.eq.s32.totalorder %v530, %v507
  %vm573 = vcmp.eq.s32.totalorder %v534, %v507
  %vm574 = vcmp.eq.s32.totalorder %v526, %v508
  %vm575 = vcmp.eq.s32.totalorder %v530, %v508
  %vm576 = vcmp.eq.s32.totalorder %v534, %v508
  %vm577 = vcmp.eq.s32.totalorder %v526, %v509
  %vm578 = vcmp.eq.s32.totalorder %v530, %v509
  %vm579 = vcmp.eq.s32.totalorder %v534, %v509
  %vm580 = vcmp.eq.s32.totalorder %v526, %v510
  %vm581 = vcmp.eq.s32.totalorder %v530, %v510
  %vm582 = vcmp.eq.s32.totalorder %v534, %v510
  %v583 = vsel %vm535, 1, 0
  %v584 = vsel %vm536, 1, 0
  %v585 = vsel %vm537, 1, 0
  %v586 = vsel %vm538, 1, 0
  %v587 = vsel %vm539, 1, 0
  %v588 = vsel %vm540, 1, 0
  %v589 = vsel %vm541, 1, 0
  %v590 = vsel %vm542, 1, 0
  %v591 = vsel %vm543, 1, 0
  %v592 = vsel %vm544, 1, 0
  %v593 = vsel %vm545, 1, 0
  %v594 = vsel %vm546, 1, 0
  %v595 = vsel %vm547, 1, 0
  %v596 = vsel %vm548, 1, 0
  %v597 = vsel %vm549, 1, 0
  %v598 = vsel %vm550, 1, 0
  %v599 = vsel %vm551, 1, 0
  %v600 = vsel %vm552, 1, 0
  %v601 = vsel %vm553, 1, 0
  %v602 = vsel %vm554, 1, 0
  %v603 = vsel %vm555, 1, 0
  %v604 = vsel %vm556, 1, 0
  %v605 = vsel %vm557, 1, 0
  %v606 = vsel %vm558, 1, 0
  %v607 = vsel %vm559, 1, 0
  %v608 = vsel %vm560, 1, 0
  %v609 = vsel %vm561, 1, 0
  %v610 = vsel %vm562, 1, 0
  %v611 = vsel %vm563, 1, 0
  %v612 = vsel %vm564, 1, 0
  %v613 = vsel %vm565, 1, 0
  %v614 = vsel %vm566, 1, 0
  %v615 = vsel %vm567, 1, 0
  %v616 = vsel %vm568, 1, 0
  %v617 = vsel %vm569, 1, 0
  %v618 = vsel %vm570, 1, 0
  %v619 = vsel %vm571, 1, 0
  %v620 = vsel %vm572, 1, 0
  %v621 = vsel %vm573, 1, 0
  %v622 = vsel %vm574, 1, 0
  %v623 = vsel %vm575, 1, 0
  %v624 = vsel %vm576, 1, 0
  %v625 = vsel %vm577, 1, 0
  %v626 = vsel %vm578, 1, 0
  %v627 = vsel %vm579, 1, 0
  %v628 = vsel %vm580, 1, 0
  %v629 = vsel %vm581, 1, 0
  %v630 = vsel %vm582, 1, 0
  %v631 = vcvt.s32.f32 %v583
  %v632 = vcvt.s32.f32 %v584
  %v633 = vcvt.s32.f32 %v585
  %v634 = vcvt.s32.f32 %v586
  %v635 = vcvt.s32.f32 %v587
  %v636 = vcvt.s32.f32 %v588
  %v637 = vcvt.s32.f32 %v589
  %v638 = vcvt.s32.f32 %v590
  %v639 = vcvt.s32.f32 %v591
  %v640 = vcvt.s32.f32 %v592
  %v641 = vcvt.s32.f32 %v593
  %v642 = vcvt.s32.f32 %v594
  %v643 = vcvt.s32.f32 %v595
  %v644 = vcvt.s32.f32 %v596
  %v645 = vcvt.s32.f32 %v597
  %v646 = vcvt.s32.f32 %v598
  %v647 = vcvt.s32.f32 %v599
  %v648 = vcvt.s32.f32 %v600
  %v649 = vcvt.s32.f32 %v601
  %v650 = vcvt.s32.f32 %v602
  %v651 = vcvt.s32.f32 %v603
  %v652 = vcvt.s32.f32 %v604
  %v653 = vcvt.s32.f32 %v605
  %v654 = vcvt.s32.f32 %v606
  %v655 = vcvt.s32.f32 %v607
  %v656 = vcvt.s32.f32 %v608
  %v657 = vcvt.s32.f32 %v609
  %v658 = vcvt.s32.f32 %v610
  %v659 = vcvt.s32.f32 %v611
  %v660 = vcvt.s32.f32 %v612
  %v661 = vcvt.s32.f32 %v613
  %v662 = vcvt.s32.f32 %v614
  %v663 = vcvt.s32.f32 %v615
  %v664 = vcvt.s32.f32 %v616
  %v665 = vcvt.s32.f32 %v617
  %v666 = vcvt.s32.f32 %v618
  %v667 = vcvt.s32.f32 %v619
  %v668 = vcvt.s32.f32 %v620
  %v669 = vcvt.s32.f32 %v621
  %v670 = vcvt.s32.f32 %v622
  %v671 = vcvt.s32.f32 %v623
  %v672 = vcvt.s32.f32 %v624
  %v673 = vcvt.s32.f32 %v625
  %v674 = vcvt.s32.f32 %v626
  %v675 = vcvt.s32.f32 %v627
  %v676 = vcvt.s32.f32 %v628
  %v677 = vcvt.s32.f32 %v629
  %v678 = vcvt.s32.f32 %v630
  %v679 = vpack.c.bf16 %v634, %v631
  %v680 = vpack.c.bf16 %v635, %v632
  %v681 = vpack.c.bf16 %v636, %v633
  %v682 = vpack.c.bf16 %v640, %v637
  %v683 = vpack.c.bf16 %v641, %v638
  %v684 = vpack.c.bf16 %v642, %v639
  %v685 = vpack.c.bf16 %v646, %v643
  %v686 = vpack.c.bf16 %v647, %v644
  %v687 = vpack.c.bf16 %v648, %v645
  %v688 = vpack.c.bf16 %v652, %v649
  %v689 = vpack.c.bf16 %v653, %v650
  %v690 = vpack.c.bf16 %v654, %v651
  %v691 = vpack.c.bf16 %v658, %v655
  %v692 = vpack.c.bf16 %v659, %v656
  %v693 = vpack.c.bf16 %v660, %v657
  %v694 = vpack.c.bf16 %v664, %v661
  %v695 = vpack.c.bf16 %v665, %v662
  %v696 = vpack.c.bf16 %v666, %v663
  %v697 = vpack.c.bf16 %v670, %v667
  %v698 = vpack.c.bf16 %v671, %v668
  %v699 = vpack.c.bf16 %v672, %v669
  %v700 = vpack.c.bf16 %v676, %v673
  %v701 = vpack.c.bf16 %v677, %v674
  %v702 = vpack.c.bf16 %v678, %v675
  %v703 = vlaneseq
  %v704 = vshrl.u32 %v703, 7
  %v705 = vsub.s32 1, %v704
  %v706 = vrot.slane %v493, %v705
  %v707 = vlaneseq
  %v708 = vshrl.u32 %v707, 7
  %v709 = vsub.s32 3, %v708
  %v710 = vrot.slane %v493, %v709
  %v711 = vlaneseq
  %v712 = vshrl.u32 %v711, 7
  %v713 = vsub.s32 5, %v712
  %v714 = vrot.slane %v493, %v713
  %v715 = vlaneseq
  %v716 = vshrl.u32 %v715, 7
  %v717 = vsub.s32 1, %v716
  %v718 = vrot.slane %v706, %v717
  %v719 = vlaneseq
  %v720 = vshrl.u32 %v719, 7
  %v721 = vsub.s32 1, %v720
  %v722 = vrot.slane %v710, %v721
  %v723 = vlaneseq
  %v724 = vshrl.u32 %v723, 7
  %v725 = vsub.s32 1, %v724
  %v726 = vrot.slane %v714, %v725
  %vm727 = vcmp.eq.s32.totalorder %v718, %v495
  %vm728 = vcmp.eq.s32.totalorder %v722, %v495
  %vm729 = vcmp.eq.s32.totalorder %v726, %v495
  %vm730 = vcmp.eq.s32.totalorder %v718, %v496
  %vm731 = vcmp.eq.s32.totalorder %v722, %v496
  %vm732 = vcmp.eq.s32.totalorder %v726, %v496
  %vm733 = vcmp.eq.s32.totalorder %v718, %v497
  %vm734 = vcmp.eq.s32.totalorder %v722, %v497
  %vm735 = vcmp.eq.s32.totalorder %v726, %v497
  %vm736 = vcmp.eq.s32.totalorder %v718, %v498
  %vm737 = vcmp.eq.s32.totalorder %v722, %v498
  %vm738 = vcmp.eq.s32.totalorder %v726, %v498
  %vm739 = vcmp.eq.s32.totalorder %v718, %v499
  %vm740 = vcmp.eq.s32.totalorder %v722, %v499
  %vm741 = vcmp.eq.s32.totalorder %v726, %v499
  %vm742 = vcmp.eq.s32.totalorder %v718, %v500
  %vm743 = vcmp.eq.s32.totalorder %v722, %v500
  %vm744 = vcmp.eq.s32.totalorder %v726, %v500
  %vm745 = vcmp.eq.s32.totalorder %v718, %v501
  %vm746 = vcmp.eq.s32.totalorder %v722, %v501
  %vm747 = vcmp.eq.s32.totalorder %v726, %v501
  %vm748 = vcmp.eq.s32.totalorder %v718, %v502
  %vm749 = vcmp.eq.s32.totalorder %v722, %v502
  %vm750 = vcmp.eq.s32.totalorder %v726, %v502
  %vm751 = vcmp.eq.s32.totalorder %v718, %v503
  %vm752 = vcmp.eq.s32.totalorder %v722, %v503
  %vm753 = vcmp.eq.s32.totalorder %v726, %v503
  %vm754 = vcmp.eq.s32.totalorder %v718, %v504
  %vm755 = vcmp.eq.s32.totalorder %v722, %v504
  %vm756 = vcmp.eq.s32.totalorder %v726, %v504
  %vm757 = vcmp.eq.s32.totalorder %v718, %v505
  %vm758 = vcmp.eq.s32.totalorder %v722, %v505
  %vm759 = vcmp.eq.s32.totalorder %v726, %v505
  %vm760 = vcmp.eq.s32.totalorder %v718, %v506
  %vm761 = vcmp.eq.s32.totalorder %v722, %v506
  %vm762 = vcmp.eq.s32.totalorder %v726, %v506
  %vm763 = vcmp.eq.s32.totalorder %v718, %v507
  %vm764 = vcmp.eq.s32.totalorder %v722, %v507
  %vm765 = vcmp.eq.s32.totalorder %v726, %v507
  %vm766 = vcmp.eq.s32.totalorder %v718, %v508
  %vm767 = vcmp.eq.s32.totalorder %v722, %v508
  %vm768 = vcmp.eq.s32.totalorder %v726, %v508
  %vm769 = vcmp.eq.s32.totalorder %v718, %v509
  %vm770 = vcmp.eq.s32.totalorder %v722, %v509
  %vm771 = vcmp.eq.s32.totalorder %v726, %v509
  %vm772 = vcmp.eq.s32.totalorder %v718, %v510
  %vm773 = vcmp.eq.s32.totalorder %v722, %v510
  %vm774 = vcmp.eq.s32.totalorder %v726, %v510
  %v775 = vsel %vm727, 1, 0
  %v776 = vsel %vm728, 1, 0
  %v777 = vsel %vm729, 1, 0
  %v778 = vsel %vm730, 1, 0
  %v779 = vsel %vm731, 1, 0
  %v780 = vsel %vm732, 1, 0
  %v781 = vsel %vm733, 1, 0
  %v782 = vsel %vm734, 1, 0
  %v783 = vsel %vm735, 1, 0
  %v784 = vsel %vm736, 1, 0
  %v785 = vsel %vm737, 1, 0
  %v786 = vsel %vm738, 1, 0
  %v787 = vsel %vm739, 1, 0
  %v788 = vsel %vm740, 1, 0
  %v789 = vsel %vm741, 1, 0
  %v790 = vsel %vm742, 1, 0
  %v791 = vsel %vm743, 1, 0
  %v792 = vsel %vm744, 1, 0
  %v793 = vsel %vm745, 1, 0
  %v794 = vsel %vm746, 1, 0
  %v795 = vsel %vm747, 1, 0
  %v796 = vsel %vm748, 1, 0
  %v797 = vsel %vm749, 1, 0
  %v798 = vsel %vm750, 1, 0
  %v799 = vsel %vm751, 1, 0
  %v800 = vsel %vm752, 1, 0
  %v801 = vsel %vm753, 1, 0
  %v802 = vsel %vm754, 1, 0
  %v803 = vsel %vm755, 1, 0
  %v804 = vsel %vm756, 1, 0
  %v805 = vsel %vm757, 1, 0
  %v806 = vsel %vm758, 1, 0
  %v807 = vsel %vm759, 1, 0
  %v808 = vsel %vm760, 1, 0
  %v809 = vsel %vm761, 1, 0
  %v810 = vsel %vm762, 1, 0
  %v811 = vsel %vm763, 1, 0
  %v812 = vsel %vm764, 1, 0
  %v813 = vsel %vm765, 1, 0
  %v814 = vsel %vm766, 1, 0
  %v815 = vsel %vm767, 1, 0
  %v816 = vsel %vm768, 1, 0
  %v817 = vsel %vm769, 1, 0
  %v818 = vsel %vm770, 1, 0
  %v819 = vsel %vm771, 1, 0
  %v820 = vsel %vm772, 1, 0
  %v821 = vsel %vm773, 1, 0
  %v822 = vsel %vm774, 1, 0
  %v823 = vcvt.s32.f32 %v775
  %v824 = vcvt.s32.f32 %v776
  %v825 = vcvt.s32.f32 %v777
  %v826 = vcvt.s32.f32 %v778
  %v827 = vcvt.s32.f32 %v779
  %v828 = vcvt.s32.f32 %v780
  %v829 = vcvt.s32.f32 %v781
  %v830 = vcvt.s32.f32 %v782
  %v831 = vcvt.s32.f32 %v783
  %v832 = vcvt.s32.f32 %v784
  %v833 = vcvt.s32.f32 %v785
  %v834 = vcvt.s32.f32 %v786
  %v835 = vcvt.s32.f32 %v787
  %v836 = vcvt.s32.f32 %v788
  %v837 = vcvt.s32.f32 %v789
  %v838 = vcvt.s32.f32 %v790
  %v839 = vcvt.s32.f32 %v791
  %v840 = vcvt.s32.f32 %v792
  %v841 = vcvt.s32.f32 %v793
  %v842 = vcvt.s32.f32 %v794
  %v843 = vcvt.s32.f32 %v795
  %v844 = vcvt.s32.f32 %v796
  %v845 = vcvt.s32.f32 %v797
  %v846 = vcvt.s32.f32 %v798
  %v847 = vcvt.s32.f32 %v799
  %v848 = vcvt.s32.f32 %v800
  %v849 = vcvt.s32.f32 %v801
  %v850 = vcvt.s32.f32 %v802
  %v851 = vcvt.s32.f32 %v803
  %v852 = vcvt.s32.f32 %v804
  %v853 = vcvt.s32.f32 %v805
  %v854 = vcvt.s32.f32 %v806
  %v855 = vcvt.s32.f32 %v807
  %v856 = vcvt.s32.f32 %v808
  %v857 = vcvt.s32.f32 %v809
  %v858 = vcvt.s32.f32 %v810
  %v859 = vcvt.s32.f32 %v811
  %v860 = vcvt.s32.f32 %v812
  %v861 = vcvt.s32.f32 %v813
  %v862 = vcvt.s32.f32 %v814
  %v863 = vcvt.s32.f32 %v815
  %v864 = vcvt.s32.f32 %v816
  %v865 = vcvt.s32.f32 %v817
  %v866 = vcvt.s32.f32 %v818
  %v867 = vcvt.s32.f32 %v819
  %v868 = vcvt.s32.f32 %v820
  %v869 = vcvt.s32.f32 %v821
  %v870 = vcvt.s32.f32 %v822
  %v871 = vpack.c.bf16 %v826, %v823
  %v872 = vpack.c.bf16 %v827, %v824
  %v873 = vpack.c.bf16 %v828, %v825
  %v874 = vpack.c.bf16 %v832, %v829
  %v875 = vpack.c.bf16 %v833, %v830
  %v876 = vpack.c.bf16 %v834, %v831
  %v877 = vpack.c.bf16 %v838, %v835
  %v878 = vpack.c.bf16 %v839, %v836
  %v879 = vpack.c.bf16 %v840, %v837
  %v880 = vpack.c.bf16 %v844, %v841
  %v881 = vpack.c.bf16 %v845, %v842
  %v882 = vpack.c.bf16 %v846, %v843
  %v883 = vpack.c.bf16 %v850, %v847
  %v884 = vpack.c.bf16 %v851, %v848
  %v885 = vpack.c.bf16 %v852, %v849
  %v886 = vpack.c.bf16 %v856, %v853
  %v887 = vpack.c.bf16 %v857, %v854
  %v888 = vpack.c.bf16 %v858, %v855
  %v889 = vpack.c.bf16 %v862, %v859
  %v890 = vpack.c.bf16 %v863, %v860
  %v891 = vpack.c.bf16 %v864, %v861
  %v892 = vpack.c.bf16 %v868, %v865
  %v893 = vpack.c.bf16 %v869, %v866
  %v894 = vpack.c.bf16 %v870, %v867
  %895 = vmatprep.subr.bf16.mxu0 %v680
  %896 = vmatpush1.bf16.xpose.msra.mxu0 %v679
  %897 = vmatprep.subr.bf16.mxu0 %v683
  %898 = vmatpush1.bf16.xpose.msra.mxu0 %v682
  %899 = vmatprep.subr.bf16.mxu0 %v686
  %900 = vmatpush1.bf16.xpose.msra.mxu0 %v685
  %901 = vmatprep.subr.bf16.mxu0 %v689
  %902 = vmatpush1.bf16.xpose.msra.mxu0 %v688
  %903 = vmatprep.subr.bf16.mxu0 %v692
  %904 = vmatpush1.bf16.xpose.msra.mxu0 %v691
  %905 = vmatprep.subr.bf16.mxu0 %v695
  %906 = vmatpush1.bf16.xpose.msra.mxu0 %v694
  %907 = vmatprep.subr.bf16.mxu0 %v698
  %908 = vmatpush1.bf16.xpose.msra.mxu0 %v697
  %909 = vmatprep.subr.bf16.mxu0 %v701
  %910 = vmatpush1.bf16.xpose.msra.mxu0 %v700
  %911 = vmatprep.subr.bf16.mxu0 0
  %912 = vmatpush1.bf16.xpose.msra.mxu0 0
  %913 = vmatprep.subr.bf16.mxu0 0
  %914 = vmatpush1.bf16.xpose.msra.mxu0 0
  %915 = vmatprep.subr.bf16.mxu0 0
  %916 = vmatpush1.bf16.xpose.msra.mxu0 0
  %917 = vmatprep.subr.bf16.mxu0 0
  %918 = vmatpush1.bf16.xpose.msra.mxu0 0
  %919 = vmatprep.subr.bf16.mxu0 0
  %920 = vmatpush1.bf16.xpose.msra.mxu0 0
  %921 = vmatprep.subr.bf16.mxu0 0
  %922 = vmatpush1.bf16.xpose.msra.mxu0 0
  %923 = vmatprep.subr.bf16.mxu0 0
  %924 = vmatpush1.bf16.xpose.msra.mxu0 0
  %925 = vmatprep.subr.bf16.mxu0 0
  %926 = vmatpush1.bf16.xpose.msra.mxu0 0
  %927 = vmatprep.mubr.bf16.mxu0 %v872
  %928 = vmatmul.mubr.bf16.gmra.mrb[0].mxu0 %v871
  %v929 = vpop.f32.mrb[0].mxu0
  %v930 = vadd.f32 0.0, %v929
  %v931 = vpop.f32.mrb[0].mxu0
  %v932 = vpop.f32.mrb[0].mxu0
  %v933 = vadd.f32 0.0, %v932
  %v934 = vpop.f32.mrb[0].mxu0
  %935 = vmatprep.mubr.bf16.mxu0 %v875
  %936 = vmatmul.mubr.bf16.gmra.mrb[0].mxu0 %v874
  %v937 = vpop.f32.mrb[0].mxu0
  %v938 = vadd.f32 0.0, %v937
  %v939 = vpop.f32.mrb[0].mxu0
  %v940 = vpop.f32.mrb[0].mxu0
  %v941 = vadd.f32 0.0, %v940
  %v942 = vpop.f32.mrb[0].mxu0
  %943 = vmatprep.mubr.bf16.mxu0 %v878
  %944 = vmatmul.mubr.bf16.gmra.mrb[0].mxu0 %v877
  %v945 = vpop.f32.mrb[0].mxu0
  %v946 = vadd.f32 0.0, %v945
  %v947 = vpop.f32.mrb[0].mxu0
  %v948 = vpop.f32.mrb[0].mxu0
  %v949 = vadd.f32 0.0, %v948
  %v950 = vpop.f32.mrb[0].mxu0
  %951 = vmatprep.mubr.bf16.mxu0 %v881
  %952 = vmatmul.mubr.bf16.gmra.mrb[0].mxu0 %v880
  %v953 = vpop.f32.mrb[0].mxu0
  %v954 = vadd.f32 0.0, %v953
  %v955 = vpop.f32.mrb[0].mxu0
  %v956 = vpop.f32.mrb[0].mxu0
  %v957 = vadd.f32 0.0, %v956
  %v958 = vpop.f32.mrb[0].mxu0
  %959 = vmatprep.mubr.bf16.mxu0 %v884
  %960 = vmatmul.mubr.bf16.gmra.mrb[0].mxu0 %v883
  %v961 = vpop.f32.mrb[0].mxu0
  %v962 = vadd.f32 0.0, %v961
  %v963 = vpop.f32.mrb[0].mxu0
  %v964 = vpop.f32.mrb[0].mxu0
  %v965 = vadd.f32 0.0, %v964
  %v966 = vpop.f32.mrb[0].mxu0
  %967 = vmatprep.mubr.bf16.mxu0 %v887
  %968 = vmatmul.mubr.bf16.gmra.mrb[0].mxu0 %v886
  %v969 = vpop.f32.mrb[0].mxu0
  %v970 = vadd.f32 0.0, %v969
  %v971 = vpop.f32.mrb[0].mxu0
  %v972 = vpop.f32.mrb[0].mxu0
  %v973 = vadd.f32 0.0, %v972
  %v974 = vpop.f32.mrb[0].mxu0
  %975 = vmatprep.mubr.bf16.mxu0 %v890
  %976 = vmatmul.mubr.bf16.gmra.mrb[0].mxu0 %v889
  %v977 = vpop.f32.mrb[0].mxu0
  %v978 = vadd.f32 0.0, %v977
  %v979 = vpop.f32.mrb[0].mxu0
  %v980 = vpop.f32.mrb[0].mxu0
  %v981 = vadd.f32 0.0, %v980
  %v982 = vpop.f32.mrb[0].mxu0
  %983 = vmatprep.mubr.bf16.mxu0 %v893
  %984 = vmatmul.mubr.bf16.gmra.mrb[0].mxu0 %v892
  %v985 = vpop.f32.mrb[0].mxu0
  %v986 = vadd.f32 0.0, %v985
  %v987 = vpop.f32.mrb[0].mxu0
  %v988 = vpop.f32.mrb[0].mxu0
  %v989 = vadd.f32 0.0, %v988
  %v990 = vpop.f32.mrb[0].mxu0
  %991 = vdwg.mxu0
  %992 = vmatprep.subr.bf16.mxu0 0
  %993 = vmatpush1.bf16.xpose.msra.mxu0 %v681
  %994 = vmatprep.subr.bf16.mxu0 0
  %995 = vmatpush1.bf16.xpose.msra.mxu0 %v684
  %996 = vmatprep.subr.bf16.mxu0 0
  %997 = vmatpush1.bf16.xpose.msra.mxu0 %v687
  %998 = vmatprep.subr.bf16.mxu0 0
  %999 = vmatpush1.bf16.xpose.msra.mxu0 %v690
  %1000 = vmatprep.subr.bf16.mxu0 0
  %1001 = vmatpush1.bf16.xpose.msra.mxu0 %v693
  %1002 = vmatprep.subr.bf16.mxu0 0
  %1003 = vmatpush1.bf16.xpose.msra.mxu0 %v696
  %1004 = vmatprep.subr.bf16.mxu0 0
  %1005 = vmatpush1.bf16.xpose.msra.mxu0 %v699
  %1006 = vmatprep.subr.bf16.mxu0 0
  %1007 = vmatpush1.bf16.xpose.msra.mxu0 %v702
  %1008 = vmatprep.subr.bf16.mxu0 0
  %1009 = vmatpush1.bf16.xpose.msra.mxu0 0
  %1010 = vmatprep.subr.bf16.mxu0 0
  %1011 = vmatpush1.bf16.xpose.msra.mxu0 0
  %1012 = vmatprep.subr.bf16.mxu0 0
  %1013 = vmatpush1.bf16.xpose.msra.mxu0 0
  %1014 = vmatprep.subr.bf16.mxu0 0
  %1015 = vmatpush1.bf16.xpose.msra.mxu0 0
  %1016 = vmatprep.subr.bf16.mxu0 0
  %1017 = vmatpush1.bf16.xpose.msra.mxu0 0
  %1018 = vmatprep.subr.bf16.mxu0 0
  %1019 = vmatpush1.bf16.xpose.msra.mxu0 0
  %1020 = vmatprep.subr.bf16.mxu0 0
  %1021 = vmatpush1.bf16.xpose.msra.mxu0 0
  %1022 = vmatprep.subr.bf16.mxu0 0
  %1023 = vmatpush1.bf16.xpose.msra.mxu0 0
  %1024 = vmatprep.mubr.bf16.mxu0 0
  %1025 = vmatmul.mubr.bf16.gmra.mrb[0].mxu0 %v873
  %v1026 = vpop.f32.mrb[0].mxu0
  %v1027 = vadd.f32 %v930, %v1026
  %v1028 = vpop.f32.mrb[0].mxu0
  %v1029 = vpop.f32.mrb[0].mxu0
  %v1030 = vadd.f32 %v933, %v1029
  %v1031 = vpop.f32.mrb[0].mxu0
  %1032 = vmatprep.mubr.bf16.mxu0 0
  %1033 = vmatmul.mubr.bf16.gmra.mrb[0].mxu0 %v876
  %v1034 = vpop.f32.mrb[0].mxu0
  %v1035 = vadd.f32 %v938, %v1034
  %v1036 = vpop.f32.mrb[0].mxu0
  %v1037 = vpop.f32.mrb[0].mxu0
  %v1038 = vadd.f32 %v941, %v1037
  %v1039 = vpop.f32.mrb[0].mxu0
  %1040 = vmatprep.mubr.bf16.mxu0 0
  %1041 = vmatmul.mubr.bf16.gmra.mrb[0].mxu0 %v879
  %v1042 = vpop.f32.mrb[0].mxu0
  %v1043 = vadd.f32 %v946, %v1042
  %v1044 = vpop.f32.mrb[0].mxu0
  %v1045 = vpop.f32.mrb[0].mxu0
  %v1046 = vadd.f32 %v949, %v1045
  %v1047 = vpop.f32.mrb[0].mxu0
  %1048 = vmatprep.mubr.bf16.mxu0 0
  %1049 = vmatmul.mubr.bf16.gmra.mrb[0].mxu0 %v882
  %v1050 = vpop.f32.mrb[0].mxu0
  %v1051 = vadd.f32 %v954, %v1050
  %v1052 = vpop.f32.mrb[0].mxu0
  %v1053 = vpop.f32.mrb[0].mxu0
  %v1054 = vadd.f32 %v957, %v1053
  %v1055 = vpop.f32.mrb[0].mxu0
  %1056 = vmatprep.mubr.bf16.mxu0 0
  %1057 = vmatmul.mubr.bf16.gmra.mrb[0].mxu0 %v885
  %v1058 = vpop.f32.mrb[0].mxu0
  %v1059 = vadd.f32 %v962, %v1058
  %v1060 = vpop.f32.mrb[0].mxu0
  %v1061 = vpop.f32.mrb[0].mxu0
  %v1062 = vadd.f32 %v965, %v1061
  %v1063 = vpop.f32.mrb[0].mxu0
  %1064 = vmatprep.mubr.bf16.mxu0 0
  %1065 = vmatmul.mubr.bf16.gmra.mrb[0].mxu0 %v888
  %v1066 = vpop.f32.mrb[0].mxu0
  %v1067 = vadd.f32 %v970, %v1066
  %v1068 = vpop.f32.mrb[0].mxu0
  %v1069 = vpop.f32.mrb[0].mxu0
  %v1070 = vadd.f32 %v973, %v1069
  %v1071 = vpop.f32.mrb[0].mxu0
  %1072 = vmatprep.mubr.bf16.mxu0 0
  %1073 = vmatmul.mubr.bf16.gmra.mrb[0].mxu0 %v891
  %v1074 = vpop.f32.mrb[0].mxu0
  %v1075 = vadd.f32 %v978, %v1074
  %v1076 = vpop.f32.mrb[0].mxu0
  %v1077 = vpop.f32.mrb[0].mxu0
  %v1078 = vadd.f32 %v981, %v1077
  %v1079 = vpop.f32.mrb[0].mxu0
  %1080 = vmatprep.mubr.bf16.mxu0 0
  %1081 = vmatmul.mubr.bf16.gmra.mrb[0].mxu0 %v894
  %v1082 = vpop.f32.mrb[0].mxu0
  %v1083 = vadd.f32 %v986, %v1082
  %v1084 = vpop.f32.mrb[0].mxu0
  %v1085 = vpop.f32.mrb[0].mxu0
  %v1086 = vadd.f32 %v989, %v1085
  %v1087 = vpop.f32.mrb[0].mxu0
  %1088 = vdwg.mxu0
  %v1089 = vlaneseq
  %v1090 = vand.u32 %v1089, 127
  %vm1091 = vcmp.eq.s32.totalorder %v495, %v1090
  %vm1092 = vcmp.eq.s32.totalorder %v496, %v1090
  %vm1093 = vcmp.eq.s32.totalorder %v497, %v1090
  %vm1094 = vcmp.eq.s32.totalorder %v498, %v1090
  %vm1095 = vcmp.eq.s32.totalorder %v499, %v1090
  %vm1096 = vcmp.eq.s32.totalorder %v500, %v1090
  %vm1097 = vcmp.eq.s32.totalorder %v501, %v1090
  %vm1098 = vcmp.eq.s32.totalorder %v502, %v1090
  %vm1099 = vcmp.eq.s32.totalorder %v503, %v1090
  %vm1100 = vcmp.eq.s32.totalorder %v504, %v1090
  %vm1101 = vcmp.eq.s32.totalorder %v505, %v1090
  %vm1102 = vcmp.eq.s32.totalorder %v506, %v1090
  %vm1103 = vcmp.eq.s32.totalorder %v507, %v1090
  %vm1104 = vcmp.eq.s32.totalorder %v508, %v1090
  %vm1105 = vcmp.eq.s32.totalorder %v509, %v1090
  %vm1106 = vcmp.eq.s32.totalorder %v510, %v1090
  %v1107 = vsel %vm1091, 1, 0
  %v1108 = vsel %vm1092, 1, 0
  %v1109 = vsel %vm1093, 1, 0
  %v1110 = vsel %vm1094, 1, 0
  %v1111 = vsel %vm1095, 1, 0
  %v1112 = vsel %vm1096, 1, 0
  %v1113 = vsel %vm1097, 1, 0
  %v1114 = vsel %vm1098, 1, 0
  %v1115 = vsel %vm1099, 1, 0
  %v1116 = vsel %vm1100, 1, 0
  %v1117 = vsel %vm1101, 1, 0
  %v1118 = vsel %vm1102, 1, 0
  %v1119 = vsel %vm1103, 1, 0
  %v1120 = vsel %vm1104, 1, 0
  %v1121 = vsel %vm1105, 1, 0
  %v1122 = vsel %vm1106, 1, 0
  %v1123 = vcvt.s32.f32 %v1107
  %v1124 = vcvt.s32.f32 %v1108
  %v1125 = vcvt.s32.f32 %v1109
  %v1126 = vcvt.s32.f32 %v1110
  %v1127 = vcvt.s32.f32 %v1111
  %v1128 = vcvt.s32.f32 %v1112
  %v1129 = vcvt.s32.f32 %v1113
  %v1130 = vcvt.s32.f32 %v1114
  %v1131 = vcvt.s32.f32 %v1115
  %v1132 = vcvt.s32.f32 %v1116
  %v1133 = vcvt.s32.f32 %v1117
  %v1134 = vcvt.s32.f32 %v1118
  %v1135 = vcvt.s32.f32 %v1119
  %v1136 = vcvt.s32.f32 %v1120
  %v1137 = vcvt.s32.f32 %v1121
  %v1138 = vcvt.s32.f32 %v1122
  %v1139 = vmax.f32 %v1027, %v1123
  %v1140 = vmax.f32 %v1030, %v1124
  %v1141 = vmax.f32 %v1035, %v1125
  %v1142 = vmax.f32 %v1038, %v1126
  %v1143 = vmax.f32 %v1043, %v1127
  %v1144 = vmax.f32 %v1046, %v1128
  %v1145 = vmax.f32 %v1051, %v1129
  %v1146 = vmax.f32 %v1054, %v1130
  %v1147 = vmax.f32 %v1059, %v1131
  %v1148 = vmax.f32 %v1062, %v1132
  %v1149 = vmax.f32 %v1067, %v1133
  %v1150 = vmax.f32 %v1070, %v1134
  %v1151 = vmax.f32 %v1075, %v1135
  %v1152 = vmax.f32 %v1078, %v1136
  %v1153 = vmax.f32 %v1083, %v1137
  %v1154 = vmax.f32 %v1086, %v1138
  %1155 = vadd.xlane.f32.xlu0 %v1139
  %v1156 = vpop.xlane.xlu0 %1155
  %1157 = vadd.xlane.f32.xlu0 %v1140
  %v1158 = vpop.xlane.xlu0 %1157
  %1159 = vadd.xlane.f32.xlu0 %v1141
  %v1160 = vpop.xlane.xlu0 %1159
  %1161 = vadd.xlane.f32.xlu0 %v1142
  %v1162 = vpop.xlane.xlu0 %1161
  %1163 = vadd.xlane.f32.xlu0 %v1143
  %v1164 = vpop.xlane.xlu0 %1163
  %1165 = vadd.xlane.f32.xlu0 %v1144
  %v1166 = vpop.xlane.xlu0 %1165
  %1167 = vadd.xlane.f32.xlu0 %v1145
  %v1168 = vpop.xlane.xlu0 %1167
  %1169 = vadd.xlane.f32.xlu0 %v1146
  %v1170 = vpop.xlane.xlu0 %1169
  %1171 = vadd.xlane.f32.xlu0 %v1147
  %v1172 = vpop.xlane.xlu0 %1171
  %1173 = vadd.xlane.f32.xlu0 %v1148
  %v1174 = vpop.xlane.xlu0 %1173
  %1175 = vadd.xlane.f32.xlu0 %v1149
  %v1176 = vpop.xlane.xlu0 %1175
  %1177 = vadd.xlane.f32.xlu0 %v1150
  %v1178 = vpop.xlane.xlu0 %1177
  %1179 = vadd.xlane.f32.xlu0 %v1151
  %v1180 = vpop.xlane.xlu0 %1179
  %1181 = vadd.xlane.f32.xlu0 %v1152
  %v1182 = vpop.xlane.xlu0 %1181
  %1183 = vadd.xlane.f32.xlu0 %v1153
  %v1184 = vpop.xlane.xlu0 %1183
  %1185 = vadd.xlane.f32.xlu0 %v1154
  %v1186 = vpop.xlane.xlu0 %1185
  %v1187 = vrsqrt.pop %v1156
  %v1188 = vrsqrt.pop %v1158
  %v1189 = vrsqrt.pop %v1160
  %v1190 = vrsqrt.pop %v1162
  %v1191 = vrsqrt.pop %v1164
  %v1192 = vrsqrt.pop %v1166
  %v1193 = vrsqrt.pop %v1168
  %v1194 = vrsqrt.pop %v1170
  %v1195 = vrsqrt.pop %v1172
  %v1196 = vrsqrt.pop %v1174
  %v1197 = vrsqrt.pop %v1176
  %v1198 = vrsqrt.pop %v1178
  %v1199 = vrsqrt.pop %v1180
  %v1200 = vrsqrt.pop %v1182
  %v1201 = vrsqrt.pop %v1184
  %v1202 = vrsqrt.pop %v1186
  %v1203 = vmul.f32 %v415, %v1187
  %v1204 = vmul.f32 %v420, %v1188
  %v1205 = vmul.f32 %v425, %v1189
  %v1206 = vmul.f32 %v430, %v1190
  %v1207 = vmul.f32 %v435, %v1191
  %v1208 = vmul.f32 %v440, %v1192
  %v1209 = vmul.f32 %v445, %v1193
  %v1210 = vmul.f32 %v450, %v1194
  %v1211 = vmul.f32 %v455, %v1195
  %v1212 = vmul.f32 %v460, %v1196
  %v1213 = vmul.f32 %v465, %v1197
  %v1214 = vmul.f32 %v470, %v1198
  %v1215 = vmul.f32 %v475, %v1199
  %v1216 = vmul.f32 %v480, %v1200
  %v1217 = vmul.f32 %v485, %v1201
  %v1218 = vmul.f32 %v490, %v1202
  %1219 = vmatprep.subr.mxu0 0.0
  %1220 = vmatpush1.msra.mxu0 %v1203
  %1221 = vmatprep.subr.mxu0 0.0
  %1222 = vmatpush1.msra.mxu0 %v1204
  %1223 = vmatprep.subr.mxu0 0.0
  %1224 = vmatpush1.msra.mxu0 %v1205
  %1225 = vmatprep.subr.mxu0 0.0
  %1226 = vmatpush1.msra.mxu0 %v1206
  %1227 = vmatprep.subr.mxu0 0.0
  %1228 = vmatpush1.msra.mxu0 %v1207
  %1229 = vmatprep.subr.mxu0 0.0
  %1230 = vmatpush1.msra.mxu0 %v1208
  %1231 = vmatprep.subr.mxu0 0.0
  %1232 = vmatpush1.msra.mxu0 %v1209
  %1233 = vmatprep.subr.mxu0 0.0
  %1234 = vmatpush1.msra.mxu0 %v1210
  %1235 = vmatprep.subr.mxu0 0.0
  %1236 = vmatpush1.msra.mxu0 %v1211
  %1237 = vmatprep.subr.mxu0 0.0
  %1238 = vmatpush1.msra.mxu0 %v1212
  %1239 = vmatprep.subr.mxu0 0.0
  %1240 = vmatpush1.msra.mxu0 %v1213
  %1241 = vmatprep.subr.mxu0 0.0
  %1242 = vmatpush1.msra.mxu0 %v1214
  %1243 = vmatprep.subr.mxu0 0.0
  %1244 = vmatpush1.msra.mxu0 %v1215
  %1245 = vmatprep.subr.mxu0 0.0
  %1246 = vmatpush1.msra.mxu0 %v1216
  %1247 = vmatprep.subr.mxu0 0.0
  %1248 = vmatpush1.msra.mxu0 %v1217
  %1249 = vmatprep.subr.mxu0 0.0
  %1250 = vmatpush1.msra.mxu0 %v1218
  %1251 = vmatprep.subr.mxu0 0.0
  %1252 = vmatpush1.msra.mxu0 0.0
  %1253 = vmatprep.subr.mxu0 0.0
  %1254 = vmatpush1.msra.mxu0 0.0
  %1255 = vmatprep.subr.mxu0 0.0
  %1256 = vmatpush1.msra.mxu0 0.0
  %1257 = vmatprep.subr.mxu0 0.0
  %1258 = vmatpush1.msra.mxu0 0.0
  %1259 = vmatprep.subr.mxu0 0.0
  %1260 = vmatpush1.msra.mxu0 0.0
  %1261 = vmatprep.subr.mxu0 0.0
  %1262 = vmatpush1.msra.mxu0 0.0
  %1263 = vmatprep.subr.mxu0 0.0
  %1264 = vmatpush1.msra.mxu0 0.0
  %1265 = vmatprep.subr.mxu0 0.0
  %1266 = vmatpush1.msra.mxu0 0.0
  %1267 = vmatprep.subr.mxu0 0.0
  %1268 = vmatpush1.msra.mxu0 0.0
  %1269 = vmatprep.subr.mxu0 0.0
  %1270 = vmatpush1.msra.mxu0 0.0
  %1271 = vmatprep.subr.mxu0 0.0
  %1272 = vmatpush1.msra.mxu0 0.0
  %1273 = vmatprep.subr.mxu0 0.0
  %1274 = vmatpush1.msra.mxu0 0.0
  %1275 = vmatprep.subr.mxu0 0.0
  %1276 = vmatpush1.msra.mxu0 0.0
  %1277 = vmatprep.subr.mxu0 0.0
  %1278 = vmatpush1.msra.mxu0 0.0
  %1279 = vmatprep.subr.mxu0 0.0
  %1280 = vmatpush1.msra.mxu0 0.0
  %1281 = vmatprep.subr.mxu0 0.0
  %1282 = vmatpush1.msra.mxu0 0.0
  %1283 = vmatprep.mubr.f32.mxu0 0.0
  %1284 = vmatmul.mubr.f32.gmra.mrb[0].mxu0 %v1139
  %v1285 = vpop.f32.mrb[0].mxu0
  %v1286 = vadd.f32 0.0, %v1285
  %v1287 = vpop.f32.mrb[0].mxu0
  %1288 = vmatprep.mubr.f32.mxu0 0.0
  %1289 = vmatmul.mubr.f32.gmra.mrb[0].mxu0 %v1140
  %v1290 = vpop.f32.mrb[0].mxu0
  %v1291 = vadd.f32 0.0, %v1290
  %v1292 = vpop.f32.mrb[0].mxu0
  %1293 = vmatprep.mubr.f32.mxu0 0.0
  %1294 = vmatmul.mubr.f32.gmra.mrb[0].mxu0 %v1141
  %v1295 = vpop.f32.mrb[0].mxu0
  %v1296 = vadd.f32 0.0, %v1295
  %v1297 = vpop.f32.mrb[0].mxu0
  %1298 = vmatprep.mubr.f32.mxu0 0.0
  %1299 = vmatmul.mubr.f32.gmra.mrb[0].mxu0 %v1142
  %v1300 = vpop.f32.mrb[0].mxu0
  %v1301 = vadd.f32 0.0, %v1300
  %v1302 = vpop.f32.mrb[0].mxu0
  %1303 = vmatprep.mubr.f32.mxu0 0.0
  %1304 = vmatmul.mubr.f32.gmra.mrb[0].mxu0 %v1143
  %v1305 = vpop.f32.mrb[0].mxu0
  %v1306 = vadd.f32 0.0, %v1305
  %v1307 = vpop.f32.mrb[0].mxu0
  %1308 = vmatprep.mubr.f32.mxu0 0.0
  %1309 = vmatmul.mubr.f32.gmra.mrb[0].mxu0 %v1144
  %v1310 = vpop.f32.mrb[0].mxu0
  %v1311 = vadd.f32 0.0, %v1310
  %v1312 = vpop.f32.mrb[0].mxu0
  %1313 = vmatprep.mubr.f32.mxu0 0.0
  %1314 = vmatmul.mubr.f32.gmra.mrb[0].mxu0 %v1145
  %v1315 = vpop.f32.mrb[0].mxu0
  %v1316 = vadd.f32 0.0, %v1315
  %v1317 = vpop.f32.mrb[0].mxu0
  %1318 = vmatprep.mubr.f32.mxu0 0.0
  %1319 = vmatmul.mubr.f32.gmra.mrb[0].mxu0 %v1146
  %v1320 = vpop.f32.mrb[0].mxu0
  %v1321 = vadd.f32 0.0, %v1320
  %v1322 = vpop.f32.mrb[0].mxu0
  %1323 = vmatprep.mubr.f32.mxu0 0.0
  %1324 = vmatmul.mubr.f32.gmra.mrb[0].mxu0 %v1147
  %v1325 = vpop.f32.mrb[0].mxu0
  %v1326 = vadd.f32 0.0, %v1325
  %v1327 = vpop.f32.mrb[0].mxu0
  %1328 = vmatprep.mubr.f32.mxu0 0.0
  %1329 = vmatmul.mubr.f32.gmra.mrb[0].mxu0 %v1148
  %v1330 = vpop.f32.mrb[0].mxu0
  %v1331 = vadd.f32 0.0, %v1330
  %v1332 = vpop.f32.mrb[0].mxu0
  %1333 = vmatprep.mubr.f32.mxu0 0.0
  %1334 = vmatmul.mubr.f32.gmra.mrb[0].mxu0 %v1149
  %v1335 = vpop.f32.mrb[0].mxu0
  %v1336 = vadd.f32 0.0, %v1335
  %v1337 = vpop.f32.mrb[0].mxu0
  %1338 = vmatprep.mubr.f32.mxu0 0.0
  %1339 = vmatmul.mubr.f32.gmra.mrb[0].mxu0 %v1150
  %v1340 = vpop.f32.mrb[0].mxu0
  %v1341 = vadd.f32 0.0, %v1340
  %v1342 = vpop.f32.mrb[0].mxu0
  %1343 = vmatprep.mubr.f32.mxu0 0.0
  %1344 = vmatmul.mubr.f32.gmra.mrb[0].mxu0 %v1151
  %v1345 = vpop.f32.mrb[0].mxu0
  %v1346 = vadd.f32 0.0, %v1345
  %v1347 = vpop.f32.mrb[0].mxu0
  %1348 = vmatprep.mubr.f32.mxu0 0.0
  %1349 = vmatmul.mubr.f32.gmra.mrb[0].mxu0 %v1152
  %v1350 = vpop.f32.mrb[0].mxu0
  %v1351 = vadd.f32 0.0, %v1350
  %v1352 = vpop.f32.mrb[0].mxu0
  %1353 = vmatprep.mubr.f32.mxu0 0.0
  %1354 = vmatmul.mubr.f32.gmra.mrb[0].mxu0 %v1153
  %v1355 = vpop.f32.mrb[0].mxu0
  %v1356 = vadd.f32 0.0, %v1355
  %v1357 = vpop.f32.mrb[0].mxu0
  %1358 = vmatprep.mubr.f32.mxu0 0.0
  %1359 = vmatmul.mubr.f32.gmra.mrb[0].mxu0 %v1154
  %v1360 = vpop.f32.mrb[0].mxu0
  %v1361 = vadd.f32 0.0, %v1360
  %v1362 = vpop.f32.mrb[0].mxu0
  %1363 = vdwg.mxu0
  %v1364 = vmul.f32 %v1286, %v1187
  %v1365 = vmul.f32 %v1291, %v1188
  %v1366 = vmul.f32 %v1296, %v1189
  %v1367 = vmul.f32 %v1301, %v1190
  %v1368 = vmul.f32 %v1306, %v1191
  %v1369 = vmul.f32 %v1311, %v1192
  %v1370 = vmul.f32 %v1316, %v1193
  %v1371 = vmul.f32 %v1321, %v1194
  %v1372 = vmul.f32 %v1326, %v1195
  %v1373 = vmul.f32 %v1331, %v1196
  %v1374 = vmul.f32 %v1336, %v1197
  %v1375 = vmul.f32 %v1341, %v1198
  %v1376 = vmul.f32 %v1346, %v1199
  %v1377 = vmul.f32 %v1351, %v1200
  %v1378 = vmul.f32 %v1356, %v1201
  %v1379 = vmul.f32 %v1361, %v1202
  %v1380 = vld [vmem:[%s5] sm:$0x1]
  %v1382 = vlaneseq
  %v1383 = vshrl.u32 %v1382, 7
  %v1384 = vsub.s32 0, %v1383
  %v1385 = vrot.slane %v1380, %v1384
  %v1387 = vadd.f32 %v1364, %v1385
  %v1388 = vadd.f32 %v1365, %v1385
  %v1389 = vadd.f32 %v1366, %v1385
  %v1390 = vadd.f32 %v1367, %v1385
  %v1391 = vadd.f32 %v1368, %v1385
  %v1392 = vadd.f32 %v1369, %v1385
  %v1393 = vadd.f32 %v1370, %v1385
  %v1394 = vadd.f32 %v1371, %v1385
  %v1395 = vadd.f32 %v1372, %v1385
  %v1396 = vadd.f32 %v1373, %v1385
  %v1397 = vadd.f32 %v1374, %v1385
  %v1398 = vadd.f32 %v1375, %v1385
  %v1399 = vadd.f32 %v1376, %v1385
  %v1400 = vadd.f32 %v1377, %v1385
  %v1401 = vadd.f32 %v1378, %v1385
  %v1402 = vadd.f32 %v1379, %v1385
  %v1403 = vadd.f32 %v24, %v1387
  %v1404 = vadd.f32 %v25, %v1388
  %v1405 = vadd.f32 %v26, %v1389
  %v1406 = vadd.f32 %v27, %v1390
  %v1407 = vadd.f32 %v28, %v1391
  %v1408 = vadd.f32 %v29, %v1392
  %v1409 = vadd.f32 %v30, %v1393
  %v1410 = vadd.f32 %v31, %v1394
  %v1411 = vadd.f32 %v32, %v1395
  %v1412 = vadd.f32 %v33, %v1396
  %v1413 = vadd.f32 %v34, %v1397
  %v1414 = vadd.f32 %v35, %v1398
  %v1415 = vadd.f32 %v36, %v1399
  %v1416 = vadd.f32 %v37, %v1400
  %v1417 = vadd.f32 %v38, %v1401
  %v1418 = vadd.f32 %v39, %v1402
  %v1419 = vmax.f32 %v1403, 0.0
  %v1420 = vmax.f32 %v1404, 0.0
  %v1421 = vmax.f32 %v1405, 0.0
  %v1422 = vmax.f32 %v1406, 0.0
  %v1423 = vmax.f32 %v1407, 0.0
  %v1424 = vmax.f32 %v1408, 0.0
  %v1425 = vmax.f32 %v1409, 0.0
  %v1426 = vmax.f32 %v1410, 0.0
  %v1427 = vmax.f32 %v1411, 0.0
  %v1428 = vmax.f32 %v1412, 0.0
  %v1429 = vmax.f32 %v1413, 0.0
  %v1430 = vmax.f32 %v1414, 0.0
  %v1431 = vmax.f32 %v1415, 0.0
  %v1432 = vmax.f32 %v1416, 0.0
  %v1433 = vmax.f32 %v1417, 0.0
  %v1434 = vmax.f32 %v1418, 0.0
  %1435 = vst.msk [vmem:[%s6] sm:$0xff] %vm40, %v1419
  %1436 = vst.msk [vmem:[%s6 + $0x8] sm:$0xff] %vm40, %v1420
  %1437 = vst.msk [vmem:[%s6 + $0x10] sm:$0xff] %vm40, %v1421
  %1438 = vst.msk [vmem:[%s6 + $0x18] sm:$0xff] %vm40, %v1422
  %1439 = vst.msk [vmem:[%s6 + $0x20] sm:$0xff] %vm40, %v1423
  %1440 = vst.msk [vmem:[%s6 + $0x28] sm:$0xff] %vm40, %v1424
  %1441 = vst.msk [vmem:[%s6 + $0x30] sm:$0xff] %vm40, %v1425
  %1442 = vst.msk [vmem:[%s6 + $0x38] sm:$0xff] %vm40, %v1426
  %1443 = vst.msk [vmem:[%s6 + $0x40] sm:$0xff] %vm40, %v1427
  %1444 = vst.msk [vmem:[%s6 + $0x48] sm:$0xff] %vm40, %v1428
  %1445 = vst.msk [vmem:[%s6 + $0x50] sm:$0xff] %vm40, %v1429
  %1446 = vst.msk [vmem:[%s6 + $0x58] sm:$0xff] %vm40, %v1430
  %1447 = vst.msk [vmem:[%s6 + $0x60] sm:$0xff] %vm40, %v1431
  %1448 = vst.msk [vmem:[%s6 + $0x68] sm:$0xff] %vm40, %v1432
  %1449 = vst.msk [vmem:[%s6 + $0x70] sm:$0xff] %vm40, %v1433
  %1450 = vst.msk [vmem:[%s6 + $0x78] sm:$0xff] %vm40, %v1434
  // Predicated region
  $region26: #{tpu_custom_call.1} parent=0 // pred_check
    _
  $region27: #{tpu_custom_call.1} parent=0 // pred_check_branch
    %1452 = sbr.rel (0) target = $region29
  $region28: #{tpu_custom_call.1} parent=0 // pred_region
    _
  $region29: #{tpu_custom_call.1} parent=0 // pred_fallthru
    _
  // Predicated region
  $region30: #{tpu_custom_call.1} parent=0 // pred_check
    _
  $region31: #{tpu_custom_call.1} parent=0 // pred_check_branch
    %1454 = sbr.rel (0) target = $region33
  $region32: #{tpu_custom_call.1} parent=0 // pred_region
    _
  $region33: #{tpu_custom_call.1} parent=0 // pred_fallthru
    _

</llo_original>
